<compile_context>
chip_gen: v7x
topology: tpu7x:2x2x1
jax: 0.10.0
libtpu: 0.0.40
codegen_flags: <defaults>
</compile_context>

<pallas_src>
import functools

import jax
import jax.numpy as jnp
from jax.experimental import pallas as pl
from jax.experimental.pallas import tpu as pltpu

LANES = 128


def shifted_polyoid_kernel(x_ref, c_ref, m_ref, o_ref, *, power):
    # x_ref : [rows_b, dim*128]  dense slab; lane j of row r = x[128*r + j//dim, j%dim]
    # c_ref : [1, dim*128]       centers replicated so c_ref[0, j] = centers[j % dim]
    # m_ref : [dim*128, 128]     selection matrix: M[j, j//dim] = steepnesses[j % dim]
    # o_ref : [rows_b, 128]      o[r, l] = p(x[128*r + l])   (fully dense store)
    diff = x_ref[...] - c_ref[...]        # VPU, sublane-broadcast of centers
    poly = diff ** power                  # static int -> lax.integer_pow (VPU)
    # Grouped (per-`dim` adjacent lanes) steepness-weighted reduction as a matmul
    # against the constant selection matrix; output comes out batch-on-lanes.
    o_ref[...] = jnp.dot(poly, m_ref[...],
                         preferred_element_type=jnp.float32,
                         precision=jax.lax.Precision.HIGHEST)


def shifted_polyoid_forward(x, centers, steepnesses, power, *, rows_per_block=None):
    """x: [B, dim] float32; centers/steepnesses: [dim]; power: static Python int."""
    assert isinstance(power, int), "power must be a static Python int"
    B, dim = x.shape
    # TODO(synk): for very large `dim` (>~128) the resident selection matrix grows
    # past a few MiB of VMEM; this module targets the small-dim AugSILL setting.
    x = x.astype(jnp.float32)
    centers = centers.astype(jnp.float32)
    steepnesses = steepnesses.astype(jnp.float32)

    # Pad the batch only when it is not 128-aligned (aligned callers: zero copies).
    b_pad = ((B + LANES - 1) // LANES) * LANES
    if b_pad != B:
        x = jnp.pad(x, ((0, b_pad - B), (0, 0)))
    R = b_pad // LANES
    xs = x.reshape(R, dim * LANES)                     # order-preserving re-blocking

    # Lane-replicated centers and the 0/steepness selection matrix (tiny, resident).
    j = jnp.arange(dim * LANES)
    c_pat = jnp.tile(centers, LANES).reshape(1, dim * LANES)
    m_sel = jnp.zeros((dim * LANES, LANES), jnp.float32).at[j, j // dim].set(
        jnp.tile(steepnesses, LANES))

    # Tile sizing: ~2 MiB of x per grid step; keep >= 2 steps when possible so the
    # pipeline (and v7x's second TensorCore) has work to overlap.
    if rows_per_block is None:
        rows_per_block = max(8, (4096 // dim) // 8 * 8)
    if R >= 16:
        rows_per_block = min(rows_per_block, ((pl.cdiv(R, 2) + 7) // 8) * 8)
    else:
        rows_per_block = R
    grid_r = pl.cdiv(R, rows_per_block)

    kernel = functools.partial(shifted_polyoid_kernel, power=power)

    out = pl.pallas_call(
        kernel,
        out_shape=jax.ShapeDtypeStruct((grid_r * rows_per_block, LANES), jnp.float32),
        grid=(grid_r,),
        in_specs=[
            pl.BlockSpec((rows_per_block, dim * LANES), lambda i: (i, 0)),  # x slab
            pl.BlockSpec((1, dim * LANES), lambda i: (0, 0)),               # centers (resident)
            pl.BlockSpec((dim * LANES, LANES), lambda i: (0, 0)),           # selection (resident)
        ],
        out_specs=pl.BlockSpec((rows_per_block, LANES), lambda i: (i, 0)),
        compiler_params=pltpu.CompilerParams(
            dimension_semantics=("parallel",)),
        cost_estimate=pl.CostEstimate(
            flops=2 * grid_r * rows_per_block * dim * LANES * LANES
                  + 2 * b_pad * dim * max(power, 1),
            transcendentals=0,
            bytes_accessed=4 * (b_pad * dim + b_pad + dim * LANES * (LANES + 1))),
    )(xs, c_pat, m_sel)

    return out.reshape(-1)[:B]


def reference_forward(x, centers, steepnesses, power):
    # Pure-JAX reference matching the PyTorch semantics.
    return jnp.sum(steepnesses * (x - centers) ** power, axis=1)


if __name__ == "__main__":
    dim, power, batch = 3, 2, 2048   # batch multiple of 128 -> zero-copy slab view

    key = jax.random.PRNGKey(0)
    k_x, k_c, k_s = jax.random.split(key, 3)

    x = jax.random.normal(k_x, (batch, dim), jnp.float32)
    # nn.init.uniform_(param, 0, 10)
    centers = jax.random.uniform(k_c, (dim,), jnp.float32, 0.0, 10.0)
    steepnesses = jax.random.uniform(k_s, (dim,), jnp.float32, 0.0, 10.0)

    out = shifted_polyoid_forward(x, centers, steepnesses, power)
    out = jax.block_until_ready(out)

    ref = reference_forward(x, centers, steepnesses, power)
    assert out.shape == (batch,)
    assert jnp.allclose(out, ref, rtol=1e-5, atol=1e-2), "mismatch vs reference"

    print("KERNEL_OK")
</pallas_src>

<mosaic_0001>
module attributes {stable_mosaic.version = 11 : i64} {
  func.func @shifted_polyoid_kernel(%arg0: i32, %arg1: memref<8x384xf32, #tpu.memory_space<vmem>>, %arg2: memref<1x384xf32, #tpu.memory_space<vmem>>, %arg3: memref<384x128xf32, #tpu.memory_space<vmem>>, %arg4: memref<8x128xf32, #tpu.memory_space<vmem>>) attributes {dimension_semantics = [#tpu.dimension_semantics<parallel>], iteration_bounds = array<i64: 2>, scalar_prefetch = 0 : i64, scratch_operands = 0 : i64, tpu.core_type = #tpu.core_type<tc>, window_params = [{transform_indices = @transform_0, window_bounds = array<i64: 8, 384>}, {pipeline_mode = #tpu.pipeline_mode<synchronous>, transform_indices = @transform_1, window_bounds = array<i64: 1, 384>}, {pipeline_mode = #tpu.pipeline_mode<synchronous>, transform_indices = @transform_2, window_bounds = array<i64: 384, 128>}, {transform_indices = @transform_3, window_bounds = array<i64: 8, 128>}]} {
    %c0 = arith.constant 0 : index
    %c0_0 = arith.constant 0 : index
    %0 = vector.load %arg1[%c0, %c0_0] : memref<8x384xf32, #tpu.memory_space<vmem>>, vector<8x384xf32>
    %c0_1 = arith.constant 0 : index
    %c0_2 = arith.constant 0 : index
    %1 = vector.load %arg2[%c0_1, %c0_2] : memref<1x384xf32, #tpu.memory_space<vmem>>, vector<1x384xf32>
    %2 = vector.broadcast %1 : vector<1x384xf32> to vector<8x384xf32>
    %3 = arith.subf %0, %2 : vector<8x384xf32>
    %4 = arith.mulf %3, %3 : vector<8x384xf32>
    %c0_3 = arith.constant 0 : index
    %c0_4 = arith.constant 0 : index
    %5 = vector.load %arg3[%c0_3, %c0_4] : memref<384x128xf32, #tpu.memory_space<vmem>>, vector<384x128xf32>
    %cst = arith.constant dense<0.000000e+00> : vector<8x128xf32>
    %6 = tpu.matmul %4, %5, %cst {dimension_numbers = #tpu.dot_dimension_numbers<[1], [0], [0], [1], [0, 0, 1, 1], [], []>, precision = #tpu.contract_precision<fp32>} : vector<8x384xf32>, vector<384x128xf32>, vector<8x128xf32> -> vector<8x128xf32>
    %c0_5 = arith.constant 0 : index
    %c0_6 = arith.constant 0 : index
    %7 = vector.load %arg4[%c0_5, %c0_6] : memref<8x128xf32, #tpu.memory_space<vmem>>, vector<8x128xf32>
    tpu.vector_store %arg4[%c0_5, %c0_6], %6 {strides = array<i32>} : memref<8x128xf32, #tpu.memory_space<vmem>>, vector<8x128xf32>,
    return
  }
  func.func @transform_0(%arg0: i32) -> (i32, i32) {
    %c0_i32 = arith.constant 0 : i32
    %c0_i32_0 = arith.constant 0 : i32
    return %arg0, %c0_i32 : i32, i32
  }
  func.func @transform_1(%arg0: i32) -> (i32, i32) {
    %c0_i32 = arith.constant 0 : i32
    %c0_i32_0 = arith.constant 0 : i32
    %c0_i32_1 = arith.constant 0 : i32
    return %c0_i32, %c0_i32_0 : i32, i32
  }
  func.func @transform_2(%arg0: i32) -> (i32, i32) {
    %c0_i32 = arith.constant 0 : i32
    %c0_i32_0 = arith.constant 0 : i32
    %c0_i32_1 = arith.constant 0 : i32
    return %c0_i32, %c0_i32_0 : i32, i32
  }
  func.func @transform_3(%arg0: i32) -> (i32, i32) {
    %c0_i32 = arith.constant 0 : i32
    %c0_i32_0 = arith.constant 0 : i32
    return %arg0, %c0_i32 : i32, i32
  }
}

</mosaic_0001>

<llo_original>
// kernel: tpu_custom_call.1
$region0: #{tpu_custom_call.1}
  #allocation0 [shape = 'u32[]', space=smem, size = 0x4, offset = 0x4, fixed_abs, tag = 'smem constant byte address 0x4 - core index']
  #allocation1 [shape = 'u32[144,128]{1,0:T(1,128)}', space=vmem, size = 0x12000, scoped, tag = 'internal scratch']
  %s0 = inlined_call_operand.hbm [shape: f32[16,384], index: 0, kind: input, shape index: {}]
  %s1 = inlined_call_operand.vmem [shape: f32[1,384], index: 1, kind: input, shape index: {}]
  %s2 = inlined_call_operand.hbm [shape: f32[384,128], index: 2, kind: input, shape index: {}]
  %s3 = inlined_call_operand.hbm [shape: f32[16,128], index: 3, kind: output, shape index: {}]
  %s4 = sld [smem:[#allocation0]]
  $region53: #{tpu_custom_call.1} parent=0
    _
  %s6 = ssub.s32 1, %s4
  %s7 = scalar_select 0, %s6, %s4
  $region1: #{tpu_custom_call.1} parent=0
    #allocation2 [shape = 'u8[24576]{0}', space=vmem, size = 0x6000, scoped, tag = 'input window, operand 0']
    #allocation3 [shape = 's32[2]{0}', space=sflag, size = 0x8, scoped, tag = 'scoped memory for tpu_custom_call.1']
    #allocation4 [shape = 's32[2]{0}', space=sflag, size = 0x8, scoped, tag = 'scoped memory for tpu_custom_call.1']
    #allocation5 [shape = 'u8[196608]{0}', space=vmem, size = 0x30000, scoped, tag = 'input window, operand 2, single buffered']
    #allocation6 [shape = 's32[1]{0}', space=sflag, size = 0x4, scoped, tag = 'scoped memory for tpu_custom_call.1']
    #allocation7 [shape = 'u8[8192]{0}', space=vmem, size = 0x2000, scoped, tag = 'output window, operand 0']
    %8 = vsyncpa [#allocation3], 0
    %s9 = scalar_lea.sflag [#allocation3], 1
    %10 = vsyncpa %s9, 0
    %11 = vsyncpa [#allocation6], 0
    %12 = vsyncpa [#allocation4], 0
    %s13 = scalar_lea.sflag [#allocation4], 1
    %14 = vsyncpa %s13, 0
    loop: start=0, step=1, limit=4
    $region2: #{tpu_custom_call.1} parent=1 // loop_pre_header
      _
    $region3: #{tpu_custom_call.1} parent=1 // loop_header
      %s16 = sphi 0, %s20
      %p17 = scmp.ge.s32.totalorder %s16, 4
      %s26 = sphi 0, %s28
      %s29 = sphi 0, %s26
      %s30 = sphi 0, %s29
      %s46 = sphi 0, %s30
      %s50 = sphi 0, %s50
      %s52 = sphi 0, %s50
      %s53 = sphi 0, %s52
      %s67 = sphi 0, %s53
      %s71 = sphi 0, %s71
      %s73 = sphi 0, %s71
      %s74 = sphi 0, %s73
      %s88 = sphi 0, %s74
      %s94 = sphi 0, %s96
      %s97 = sphi 0, %s94
      %s98 = sphi 0, %s97
      %s114 = sphi 0, %s98
    $region4: #{tpu_custom_call.1} parent=1 // loop_header_branch
      %19 = sbr.rel (%p17) target = $region8
    $region5: #{tpu_custom_call.1} parent=1 // loop_body
      %s21 = ssub.s32 %s16, 1
      %s22 = ssub.s32 %s16, 2
      %s23 = sadd.s32 %s16, 1
      %s24 = ssub.s32 %s16, %s23
      %p25 = scmp.eq.s32.totalorder %s24, 0
      %s27 = sadd.s32 %s26, 1
      %s28 = scalar_select %p25, %s26, %s27
      %p31 = pneg %p25
      %p32 = scmp.eq.s32.totalorder %s16, 1
      %p33 = por %p31, %p32
      %p34 = scmp.ne.s32.totalorder %s26, %s29
      %p35 = scmp.eq.s32.totalorder %s16, 0
      %p36 = por %p34, %p35
      %p37 = scmp.ne.s32.totalorder %s26, %s29
      %p38 = scmp.eq.s32.totalorder %s21, 1
      %p39 = por %p37, %p38
      %p40 = scmp.ne.s32.totalorder %s29, %s30
      %p41 = scmp.eq.s32.totalorder %s21, 0
      %p42 = por %p40, %p41
      %p43 = scmp.ne.s32.totalorder %s29, %s30
      %p44 = scmp.eq.s32.totalorder %s22, 1
      %p45 = por %p43, %p44
      %p47 = scmp.ne.s32.totalorder %s30, %s46
      %p48 = scmp.eq.s32.totalorder %s22, 0
      %p49 = por %p47, %p48
      %s51 = sadd.s32 %s50, 1
      %p54 = scmp.eq.s32.totalorder %s16, 1
      %p55 = scmp.ne.s32.totalorder %s50, %s52
      %p56 = scmp.eq.s32.totalorder %s16, 0
      %p57 = por %p55, %p56
      %p58 = scmp.ne.s32.totalorder %s50, %s52
      %p59 = scmp.eq.s32.totalorder %s21, 1
      %p60 = por %p58, %p59
      %p61 = scmp.ne.s32.totalorder %s52, %s53
      %p62 = scmp.eq.s32.totalorder %s21, 0
      %p63 = por %p61, %p62
      %p64 = scmp.ne.s32.totalorder %s52, %s53
      %p65 = scmp.eq.s32.totalorder %s22, 1
      %p66 = por %p64, %p65
      %p68 = scmp.ne.s32.totalorder %s53, %s67
      %p69 = scmp.eq.s32.totalorder %s22, 0
      %p70 = por %p68, %p69
      %s72 = sadd.s32 %s71, 1
      %p75 = scmp.eq.s32.totalorder %s16, 1
      %p76 = scmp.ne.s32.totalorder %s71, %s73
      %p77 = scmp.eq.s32.totalorder %s16, 0
      %p78 = por %p76, %p77
      %p79 = scmp.ne.s32.totalorder %s71, %s73
      %p80 = scmp.eq.s32.totalorder %s21, 1
      %p81 = por %p79, %p80
      %p82 = scmp.ne.s32.totalorder %s73, %s74
      %p83 = scmp.eq.s32.totalorder %s21, 0
      %p84 = por %p82, %p83
      %p85 = scmp.ne.s32.totalorder %s73, %s74
      %p86 = scmp.eq.s32.totalorder %s22, 1
      %p87 = por %p85, %p86
      %p89 = scmp.ne.s32.totalorder %s74, %s88
      %p90 = scmp.eq.s32.totalorder %s22, 0
      %p91 = por %p89, %p90
      %s92 = ssub.s32 %s16, %s23
      %p93 = scmp.eq.s32.totalorder %s92, 0
      %s95 = sadd.s32 %s94, 1
      %s96 = scalar_select %p93, %s94, %s95
      %p99 = pneg %p93
      %p100 = scmp.eq.s32.totalorder %s16, 1
      %p101 = por %p99, %p100
      %p102 = scmp.ne.s32.totalorder %s94, %s97
      %p103 = scmp.eq.s32.totalorder %s16, 0
      %p104 = por %p102, %p103
      %p105 = scmp.ne.s32.totalorder %s94, %s97
      %p106 = scmp.eq.s32.totalorder %s21, 1
      %p107 = por %p105, %p106
      %p108 = scmp.ne.s32.totalorder %s97, %s98
      %p109 = scmp.eq.s32.totalorder %s21, 0
      %p110 = por %p108, %p109
      %p111 = scmp.ne.s32.totalorder %s97, %s98
      %p112 = scmp.eq.s32.totalorder %s22, 1
      %p113 = por %p111, %p112
      %p115 = scmp.ne.s32.totalorder %s98, %s114
      %p116 = scmp.eq.s32.totalorder %s22, 0
      %p117 = por %p115, %p116
      %p118 = scmp.le.s32.totalorder 1, %s16
      %p119 = scmp.lt.s32.totalorder %s16, 3
      %p120 = pnand %p118, %p119
      %p121 = pneg %p120
      // Predicated region
      $region9: #{tpu_custom_call.1} parent=5 // pred_check
        _
      $region10: #{tpu_custom_call.1} parent=5 // pred_check_branch
        %123 = sbr.rel (%p120) target = $region12
      $region11: #{tpu_custom_call.1} parent=5 // pred_region
        %s124 = ssub.s32 %s16, 1
        // Predicated region
        $region13: #{tpu_custom_call.1} parent=11 // pred_check
          %p125 = pneg %p63
        $region14: #{tpu_custom_call.1} parent=11 // pred_check_branch
          %127 = sbr.rel (%p125) target = $region16
        $region15: #{tpu_custom_call.1} parent=11 // pred_region
          _
        $region16: #{tpu_custom_call.1} parent=11 // pred_fallthru
          _
        // Predicated region
        $region17: #{tpu_custom_call.1} parent=11 // pred_check
          %p128 = pneg %p84
        $region18: #{tpu_custom_call.1} parent=11 // pred_check_branch
          %130 = sbr.rel (%p128) target = $region20
        $region19: #{tpu_custom_call.1} parent=11 // pred_region
          %s132 = ssub.s32 6144, 6144
          %133 = vsyncadd [#allocation6], %s132
          %s134 = sshll.u32 [#allocation5], 4
          %s135 = int_to_ptr.vmem [resolvable:$true] %s134
          %140 = dma.hbm_to_vmem [thread:$0]  %s2, 6144, %s135, [#allocation6], 128, 128, 8
        $region20: #{tpu_custom_call.1} parent=11 // pred_fallthru
          _
      $region12: #{tpu_custom_call.1} parent=5 // pred_fallthru
        _
      %p141 = scmp.lt.s32.totalorder %s16, 2
      // Predicated region
      $region21: #{tpu_custom_call.1} parent=5 // pred_check
        %p142 = pneg %p141
      $region22: #{tpu_custom_call.1} parent=5 // pred_check_branch
        %144 = sbr.rel (%p142) target = $region24
      $region23: #{tpu_custom_call.1} parent=5 // pred_region
        // Predicated region
        $region25: #{tpu_custom_call.1} parent=23 // pred_check
          %p145 = pneg %p36
        $region26: #{tpu_custom_call.1} parent=23 // pred_check_branch
          %147 = sbr.rel (%p145) target = $region28
        $region27: #{tpu_custom_call.1} parent=23 // pred_region
          %s148 = sand.u32 %s26, 1
          %s149 = scalar_lea.sflag [#allocation3], %s148
          %s150 = sand.u32 %s26, 1
          %s151 = smul.addr %s150, 24
          %s152 = scalar_lea.vmem [#allocation2], %s151
          %s154 = ssub.s32 384, 384
          %155 = vsyncadd %s149, %s154
          %s156 = smul.addr %s16, 3
          %s157 = smul.addr %s156, 128
          %s158 = scalar_lea.hbm %s0, %s157
          %s160 = sshll.u32 %s152, 4
          %s161 = int_to_ptr.vmem [resolvable:$true] %s160
          %163 = dma.hbm_to_vmem [thread:$0]  %s158, 384, %s161, %s149
        $region28: #{tpu_custom_call.1} parent=23 // pred_fallthru
          _
      $region24: #{tpu_custom_call.1} parent=5 // pred_fallthru
        _
      %p164 = scmp.le.s32.totalorder 1, %s16
      %p165 = scmp.lt.s32.totalorder %s16, 3
      %p166 = pnand %p164, %p165
      %p167 = pneg %p166
      // Predicated region
      $region29: #{tpu_custom_call.1} parent=5 // pred_check
        _
      $region30: #{tpu_custom_call.1} parent=5 // pred_check_branch
        %169 = sbr.rel (%p166) target = $region32
      $region31: #{tpu_custom_call.1} parent=5 // pred_region
        %s170 = ssub.s32 %s16, 1
        %s171 = sand.u32 %s29, 1
        %s172 = scalar_lea.sflag [#allocation3], %s171
        %s173 = sand.u32 %s29, 1
        %s174 = smul.addr %s173, 24
        %s175 = scalar_lea.vmem [#allocation2], %s174
        // Predicated region
        $region33: #{tpu_custom_call.1} parent=31 // pred_check
          %p176 = pneg %p42
        $region34: #{tpu_custom_call.1} parent=31 // pred_check_branch
          %178 = sbr.rel (%p176) target = $region36
        $region35: #{tpu_custom_call.1} parent=31 // pred_region
          %179 = dma.done %s172, 384
        $region36: #{tpu_custom_call.1} parent=31 // pred_fallthru
          _
        // Predicated region
        $region37: #{tpu_custom_call.1} parent=31 // pred_check
          %p180 = pneg %p84
        $region38: #{tpu_custom_call.1} parent=31 // pred_check_branch
          %182 = sbr.rel (%p180) target = $region40
        $region39: #{tpu_custom_call.1} parent=31 // pred_region
          %183 = dma.done [#allocation6], 6144
        $region40: #{tpu_custom_call.1} parent=31 // pred_fallthru
          _
        %s184 = sand.u32 %s29, 1
        %s185 = scalar_lea.sflag [#allocation3], %s184
        %s186 = sand.u32 %s29, 1
        %s187 = smul.addr %s186, 24
        %s188 = scalar_lea.vmem [#allocation2], %s187
        %p189 = pneg %p42
        %p190 = pneg %p39
        %p191 = pneg %p63
        %p192 = pneg %p60
        %p193 = pneg %p84
        %p194 = pneg %p81
        %p195 = pneg %p110
        %p196 = pneg %p107
        %s197 = sand.u32 %s97, 1
        %s198 = scalar_lea.sflag [#allocation4], %s197
        %s199 = sand.u32 %s97, 1
        %s200 = smul.addr %s199, 8
        %s201 = scalar_lea.vmem [#allocation7], %s200
        %v202 = vld [vmem:[%s175] sm:$0xff]
        %v203 = vld [vmem:[%s175 + $0x8] sm:$0xff]
        %v204 = vld [vmem:[%s175 + $0x10] sm:$0xff]
        %v205 = vld [vmem:[%s1] sm:$0x7]
        %v207 = vlaneseq
        %v208 = vshrl.u32 %v207, 7
        %v209 = vsub.s32 0, %v208
        %v210 = vrot.slane %v205, %v209
        %v211 = vlaneseq
        %v212 = vshrl.u32 %v211, 7
        %v213 = vsub.s32 1, %v212
        %v214 = vrot.slane %v205, %v213
        %v215 = vlaneseq
        %v216 = vshrl.u32 %v215, 7
        %v217 = vsub.s32 2, %v216
        %v218 = vrot.slane %v205, %v217
        %v222 = vsub.f32 %v202, %v210
        %v223 = vsub.f32 %v203, %v214
        %v224 = vsub.f32 %v204, %v218
        %v225 = vmul.f32 %v222, %v222
        %v226 = vmul.f32 %v223, %v223
        %v227 = vmul.f32 %v224, %v224
        %v228 = vld [vmem:[#allocation5] sm:$0xff]
        %v229 = vld [vmem:[#allocation5 + $0x8] sm:$0xff]
        %v230 = vld [vmem:[#allocation5 + $0x10] sm:$0xff]
        %v231 = vld [vmem:[#allocation5 + $0x18] sm:$0xff]
        %v232 = vld [vmem:[#allocation5 + $0x20] sm:$0xff]
        %v233 = vld [vmem:[#allocation5 + $0x28] sm:$0xff]
        %v234 = vld [vmem:[#allocation5 + $0x30] sm:$0xff]
        %v235 = vld [vmem:[#allocation5 + $0x38] sm:$0xff]
        %v236 = vld [vmem:[#allocation5 + $0x40] sm:$0xff]
        %v237 = vld [vmem:[#allocation5 + $0x48] sm:$0xff]
        %v238 = vld [vmem:[#allocation5 + $0x50] sm:$0xff]
        %v239 = vld [vmem:[#allocation5 + $0x58] sm:$0xff]
        %v240 = vld [vmem:[#allocation5 + $0x60] sm:$0xff]
        %v241 = vld [vmem:[#allocation5 + $0x68] sm:$0xff]
        %v242 = vld [vmem:[#allocation5 + $0x70] sm:$0xff]
        %v243 = vld [vmem:[#allocation5 + $0x78] sm:$0xff]
        %v244 = vld [vmem:[#allocation5 + $0x80] sm:$0xff]
        %v245 = vld [vmem:[#allocation5 + $0x88] sm:$0xff]
        %v246 = vld [vmem:[#allocation5 + $0x90] sm:$0xff]
        %v247 = vld [vmem:[#allocation5 + $0x98] sm:$0xff]
        %v248 = vld [vmem:[#allocation5 + $0xa0] sm:$0xff]
        %v249 = vld [vmem:[#allocation5 + $0xa8] sm:$0xff]
        %v250 = vld [vmem:[#allocation5 + $0xb0] sm:$0xff]
        %v251 = vld [vmem:[#allocation5 + $0xb8] sm:$0xff]
        %v252 = vld [vmem:[#allocation5 + $0xc0] sm:$0xff]
        %v253 = vld [vmem:[#allocation5 + $0xc8] sm:$0xff]
        %v254 = vld [vmem:[#allocation5 + $0xd0] sm:$0xff]
        %v255 = vld [vmem:[#allocation5 + $0xd8] sm:$0xff]
        %v256 = vld [vmem:[#allocation5 + $0xe0] sm:$0xff]
        %v257 = vld [vmem:[#allocation5 + $0xe8] sm:$0xff]
        %v258 = vld [vmem:[#allocation5 + $0xf0] sm:$0xff]
        %v259 = vld [vmem:[#allocation5 + $0xf8] sm:$0xff]
        %v260 = vld [vmem:[#allocation5 + $0x100] sm:$0xff]
        %v261 = vld [vmem:[#allocation5 + $0x108] sm:$0xff]
        %v262 = vld [vmem:[#allocation5 + $0x110] sm:$0xff]
        %v263 = vld [vmem:[#allocation5 + $0x118] sm:$0xff]
        %v264 = vld [vmem:[#allocation5 + $0x120] sm:$0xff]
        %v265 = vld [vmem:[#allocation5 + $0x128] sm:$0xff]
        %v266 = vld [vmem:[#allocation5 + $0x130] sm:$0xff]
        %v267 = vld [vmem:[#allocation5 + $0x138] sm:$0xff]
        %v268 = vld [vmem:[#allocation5 + $0x140] sm:$0xff]
        %v269 = vld [vmem:[#allocation5 + $0x148] sm:$0xff]
        %v270 = vld [vmem:[#allocation5 + $0x150] sm:$0xff]
        %v271 = vld [vmem:[#allocation5 + $0x158] sm:$0xff]
        %v272 = vld [vmem:[#allocation5 + $0x160] sm:$0xff]
        %v273 = vld [vmem:[#allocation5 + $0x168] sm:$0xff]
        %v274 = vld [vmem:[#allocation5 + $0x170] sm:$0xff]
        %v275 = vld [vmem:[#allocation5 + $0x178] sm:$0xff]
        %276 = vmatprep.subr.mxu0 0.0
        %v277 = vand.u32 %v228, 4294901760
        %278 = vmatpush1.msra.mxu0 %v277
        %279 = vmatprep.subr.mxu0 0.0
        %v280 = vand.u32 %v229, 4294901760
        %281 = vmatpush1.msra.mxu0 %v280
        %282 = vmatprep.subr.mxu0 0.0
        %v283 = vand.u32 %v230, 4294901760
        %284 = vmatpush1.msra.mxu0 %v283
        %285 = vmatprep.subr.mxu0 0.0
        %v286 = vand.u32 %v231, 4294901760
        %287 = vmatpush1.msra.mxu0 %v286
        %288 = vmatprep.subr.mxu0 0.0
        %v289 = vand.u32 %v232, 4294901760
        %290 = vmatpush1.msra.mxu0 %v289
        %291 = vmatprep.subr.mxu0 0.0
        %v292 = vand.u32 %v233, 4294901760
        %293 = vmatpush1.msra.mxu0 %v292
        %294 = vmatprep.subr.mxu0 0.0
        %v295 = vand.u32 %v234, 4294901760
        %296 = vmatpush1.msra.mxu0 %v295
        %297 = vmatprep.subr.mxu0 0.0
        %v298 = vand.u32 %v235, 4294901760
        %299 = vmatpush1.msra.mxu0 %v298
        %300 = vmatprep.subr.mxu0 0.0
        %v301 = vand.u32 %v236, 4294901760
        %302 = vmatpush1.msra.mxu0 %v301
        %303 = vmatprep.subr.mxu0 0.0
        %v304 = vand.u32 %v237, 4294901760
        %305 = vmatpush1.msra.mxu0 %v304
        %306 = vmatprep.subr.mxu0 0.0
        %v307 = vand.u32 %v238, 4294901760
        %308 = vmatpush1.msra.mxu0 %v307
        %309 = vmatprep.subr.mxu0 0.0
        %v310 = vand.u32 %v239, 4294901760
        %311 = vmatpush1.msra.mxu0 %v310
        %312 = vmatprep.subr.mxu0 0.0
        %v313 = vand.u32 %v240, 4294901760
        %314 = vmatpush1.msra.mxu0 %v313
        %315 = vmatprep.subr.mxu0 0.0
        %v316 = vand.u32 %v241, 4294901760
        %317 = vmatpush1.msra.mxu0 %v316
        %318 = vmatprep.subr.mxu0 0.0
        %v319 = vand.u32 %v242, 4294901760
        %320 = vmatpush1.msra.mxu0 %v319
        %321 = vmatprep.subr.mxu0 0.0
        %v322 = vand.u32 %v243, 4294901760
        %323 = vmatpush1.msra.mxu0 %v322
        %324 = vmatprep.subr.mxu0 0.0
        %v325 = vand.u32 %v244, 4294901760
        %326 = vmatpush1.msra.mxu0 %v325
        %327 = vmatprep.subr.mxu0 0.0
        %v328 = vand.u32 %v245, 4294901760
        %329 = vmatpush1.msra.mxu0 %v328
        %330 = vmatprep.subr.mxu0 0.0
        %v331 = vand.u32 %v246, 4294901760
        %332 = vmatpush1.msra.mxu0 %v331
        %333 = vmatprep.subr.mxu0 0.0
        %v334 = vand.u32 %v247, 4294901760
        %335 = vmatpush1.msra.mxu0 %v334
        %336 = vmatprep.subr.mxu0 0.0
        %v337 = vand.u32 %v248, 4294901760
        %338 = vmatpush1.msra.mxu0 %v337
        %339 = vmatprep.subr.mxu0 0.0
        %v340 = vand.u32 %v249, 4294901760
        %341 = vmatpush1.msra.mxu0 %v340
        %342 = vmatprep.subr.mxu0 0.0
        %v343 = vand.u32 %v250, 4294901760
        %344 = vmatpush1.msra.mxu0 %v343
        %345 = vmatprep.subr.mxu0 0.0
        %v346 = vand.u32 %v251, 4294901760
        %347 = vmatpush1.msra.mxu0 %v346
        %348 = vmatprep.subr.mxu0 0.0
        %v349 = vand.u32 %v252, 4294901760
        %350 = vmatpush1.msra.mxu0 %v349
        %351 = vmatprep.subr.mxu0 0.0
        %v352 = vand.u32 %v253, 4294901760
        %353 = vmatpush1.msra.mxu0 %v352
        %354 = vmatprep.subr.mxu0 0.0
        %v355 = vand.u32 %v254, 4294901760
        %356 = vmatpush1.msra.mxu0 %v355
        %357 = vmatprep.subr.mxu0 0.0
        %v358 = vand.u32 %v255, 4294901760
        %359 = vmatpush1.msra.mxu0 %v358
        %360 = vmatprep.subr.mxu0 0.0
        %v361 = vand.u32 %v256, 4294901760
        %362 = vmatpush1.msra.mxu0 %v361
        %363 = vmatprep.subr.mxu0 0.0
        %v364 = vand.u32 %v257, 4294901760
        %365 = vmatpush1.msra.mxu0 %v364
        %366 = vmatprep.subr.mxu0 0.0
        %v367 = vand.u32 %v258, 4294901760
        %368 = vmatpush1.msra.mxu0 %v367
        %369 = vmatprep.subr.mxu0 0.0
        %v370 = vand.u32 %v259, 4294901760
        %371 = vmatpush1.msra.mxu0 %v370
        %v372 = vand.u32 %v226, 4294901760
        %v373 = vsub.f32 %v226, %v372
        %v374 = vand.u32 %v373, 4294901760
        %v375 = vsub.f32 %v373, %v374
        %v376 = vand.u32 %v375, 4294901760
        %377 = vmatprep.mubr.f32.mxu0 %v376
        %v378 = vand.u32 %v225, 4294901760
        %v379 = vsub.f32 %v225, %v378
        %v380 = vand.u32 %v379, 4294901760
        %v381 = vsub.f32 %v379, %v380
        %v382 = vand.u32 %v381, 4294901760
        %383 = vmatmul.mubr.f32.gmra.mrb[0].mxu0 %v382
        %v384 = vpop.f32.mrb[0].mxu0
        %v385 = vadd.f32 0.0, %v384
        %v386 = vpop.f32.mrb[0].mxu0
        %387 = vdwg.mxu0
        %388 = vmatprep.subr.mxu0 0.0
        %v389 = vand.u32 %v228, 4294901760
        %v390 = vsub.f32 %v228, %v389
        %v391 = vand.u32 %v390, 4294901760
        %v392 = vsub.f32 %v390, %v391
        %v393 = vand.u32 %v392, 4294901760
        %394 = vmatpush1.msra.mxu0 %v393
        %395 = vmatprep.subr.mxu0 0.0
        %v396 = vand.u32 %v229, 4294901760
        %v397 = vsub.f32 %v229, %v396
        %v398 = vand.u32 %v397, 4294901760
        %v399 = vsub.f32 %v397, %v398
        %v400 = vand.u32 %v399, 4294901760
        %401 = vmatpush1.msra.mxu0 %v400
        %402 = vmatprep.subr.mxu0 0.0
        %v403 = vand.u32 %v230, 4294901760
        %v404 = vsub.f32 %v230, %v403
        %v405 = vand.u32 %v404, 4294901760
        %v406 = vsub.f32 %v404, %v405
        %v407 = vand.u32 %v406, 4294901760
        %408 = vmatpush1.msra.mxu0 %v407
        %409 = vmatprep.subr.mxu0 0.0
        %v410 = vand.u32 %v231, 4294901760
        %v411 = vsub.f32 %v231, %v410
        %v412 = vand.u32 %v411, 4294901760
        %v413 = vsub.f32 %v411, %v412
        %v414 = vand.u32 %v413, 4294901760
        %415 = vmatpush1.msra.mxu0 %v414
        %416 = vmatprep.subr.mxu0 0.0
        %v417 = vand.u32 %v232, 4294901760
        %v418 = vsub.f32 %v232, %v417
        %v419 = vand.u32 %v418, 4294901760
        %v420 = vsub.f32 %v418, %v419
        %v421 = vand.u32 %v420, 4294901760
        %422 = vmatpush1.msra.mxu0 %v421
        %423 = vmatprep.subr.mxu0 0.0
        %v424 = vand.u32 %v233, 4294901760
        %v425 = vsub.f32 %v233, %v424
        %v426 = vand.u32 %v425, 4294901760
        %v427 = vsub.f32 %v425, %v426
        %v428 = vand.u32 %v427, 4294901760
        %429 = vmatpush1.msra.mxu0 %v428
        %430 = vmatprep.subr.mxu0 0.0
        %v431 = vand.u32 %v234, 4294901760
        %v432 = vsub.f32 %v234, %v431
        %v433 = vand.u32 %v432, 4294901760
        %v434 = vsub.f32 %v432, %v433
        %v435 = vand.u32 %v434, 4294901760
        %436 = vmatpush1.msra.mxu0 %v435
        %437 = vmatprep.subr.mxu0 0.0
        %v438 = vand.u32 %v235, 4294901760
        %v439 = vsub.f32 %v235, %v438
        %v440 = vand.u32 %v439, 4294901760
        %v441 = vsub.f32 %v439, %v440
        %v442 = vand.u32 %v441, 4294901760
        %443 = vmatpush1.msra.mxu0 %v442
        %444 = vmatprep.subr.mxu0 0.0
        %v445 = vand.u32 %v236, 4294901760
        %v446 = vsub.f32 %v236, %v445
        %v447 = vand.u32 %v446, 4294901760
        %v448 = vsub.f32 %v446, %v447
        %v449 = vand.u32 %v448, 4294901760
        %450 = vmatpush1.msra.mxu0 %v449
        %451 = vmatprep.subr.mxu0 0.0
        %v452 = vand.u32 %v237, 4294901760
        %v453 = vsub.f32 %v237, %v452
        %v454 = vand.u32 %v453, 4294901760
        %v455 = vsub.f32 %v453, %v454
        %v456 = vand.u32 %v455, 4294901760
        %457 = vmatpush1.msra.mxu0 %v456
        %458 = vmatprep.subr.mxu0 0.0
        %v459 = vand.u32 %v238, 4294901760
        %v460 = vsub.f32 %v238, %v459
        %v461 = vand.u32 %v460, 4294901760
        %v462 = vsub.f32 %v460, %v461
        %v463 = vand.u32 %v462, 4294901760
        %464 = vmatpush1.msra.mxu0 %v463
        %465 = vmatprep.subr.mxu0 0.0
        %v466 = vand.u32 %v239, 4294901760
        %v467 = vsub.f32 %v239, %v466
        %v468 = vand.u32 %v467, 4294901760
        %v469 = vsub.f32 %v467, %v468
        %v470 = vand.u32 %v469, 4294901760
        %471 = vmatpush1.msra.mxu0 %v470
        %472 = vmatprep.subr.mxu0 0.0
        %v473 = vand.u32 %v240, 4294901760
        %v474 = vsub.f32 %v240, %v473
        %v475 = vand.u32 %v474, 4294901760
        %v476 = vsub.f32 %v474, %v475
        %v477 = vand.u32 %v476, 4294901760
        %478 = vmatpush1.msra.mxu0 %v477
        %479 = vmatprep.subr.mxu0 0.0
        %v480 = vand.u32 %v241, 4294901760
        %v481 = vsub.f32 %v241, %v480
        %v482 = vand.u32 %v481, 4294901760
        %v483 = vsub.f32 %v481, %v482
        %v484 = vand.u32 %v483, 4294901760
        %485 = vmatpush1.msra.mxu0 %v484
        %486 = vmatprep.subr.mxu0 0.0
        %v487 = vand.u32 %v242, 4294901760
        %v488 = vsub.f32 %v242, %v487
        %v489 = vand.u32 %v488, 4294901760
        %v490 = vsub.f32 %v488, %v489
        %v491 = vand.u32 %v490, 4294901760
        %492 = vmatpush1.msra.mxu0 %v491
        %493 = vmatprep.subr.mxu0 0.0
        %v494 = vand.u32 %v243, 4294901760
        %v495 = vsub.f32 %v243, %v494
        %v496 = vand.u32 %v495, 4294901760
        %v497 = vsub.f32 %v495, %v496
        %v498 = vand.u32 %v497, 4294901760
        %499 = vmatpush1.msra.mxu0 %v498
        %500 = vmatprep.subr.mxu0 0.0
        %v501 = vand.u32 %v244, 4294901760
        %v502 = vsub.f32 %v244, %v501
        %v503 = vand.u32 %v502, 4294901760
        %v504 = vsub.f32 %v502, %v503
        %v505 = vand.u32 %v504, 4294901760
        %506 = vmatpush1.msra.mxu0 %v505
        %507 = vmatprep.subr.mxu0 0.0
        %v508 = vand.u32 %v245, 4294901760
        %v509 = vsub.f32 %v245, %v508
        %v510 = vand.u32 %v509, 4294901760
        %v511 = vsub.f32 %v509, %v510
        %v512 = vand.u32 %v511, 4294901760
        %513 = vmatpush1.msra.mxu0 %v512
        %514 = vmatprep.subr.mxu0 0.0
        %v515 = vand.u32 %v246, 4294901760
        %v516 = vsub.f32 %v246, %v515
        %v517 = vand.u32 %v516, 4294901760
        %v518 = vsub.f32 %v516, %v517
        %v519 = vand.u32 %v518, 4294901760
        %520 = vmatpush1.msra.mxu0 %v519
        %521 = vmatprep.subr.mxu0 0.0
        %v522 = vand.u32 %v247, 4294901760
        %v523 = vsub.f32 %v247, %v522
        %v524 = vand.u32 %v523, 4294901760
        %v525 = vsub.f32 %v523, %v524
        %v526 = vand.u32 %v525, 4294901760
        %527 = vmatpush1.msra.mxu0 %v526
        %528 = vmatprep.subr.mxu0 0.0
        %v529 = vand.u32 %v248, 4294901760
        %v530 = vsub.f32 %v248, %v529
        %v531 = vand.u32 %v530, 4294901760
        %v532 = vsub.f32 %v530, %v531
        %v533 = vand.u32 %v532, 4294901760
        %534 = vmatpush1.msra.mxu0 %v533
        %535 = vmatprep.subr.mxu0 0.0
        %v536 = vand.u32 %v249, 4294901760
        %v537 = vsub.f32 %v249, %v536
        %v538 = vand.u32 %v537, 4294901760
        %v539 = vsub.f32 %v537, %v538
        %v540 = vand.u32 %v539, 4294901760
        %541 = vmatpush1.msra.mxu0 %v540
        %542 = vmatprep.subr.mxu0 0.0
        %v543 = vand.u32 %v250, 4294901760
        %v544 = vsub.f32 %v250, %v543
        %v545 = vand.u32 %v544, 4294901760
        %v546 = vsub.f32 %v544, %v545
        %v547 = vand.u32 %v546, 4294901760
        %548 = vmatpush1.msra.mxu0 %v547
        %549 = vmatprep.subr.mxu0 0.0
        %v550 = vand.u32 %v251, 4294901760
        %v551 = vsub.f32 %v251, %v550
        %v552 = vand.u32 %v551, 4294901760
        %v553 = vsub.f32 %v551, %v552
        %v554 = vand.u32 %v553, 4294901760
        %555 = vmatpush1.msra.mxu0 %v554
        %556 = vmatprep.subr.mxu0 0.0
        %v557 = vand.u32 %v252, 4294901760
        %v558 = vsub.f32 %v252, %v557
        %v559 = vand.u32 %v558, 4294901760
        %v560 = vsub.f32 %v558, %v559
        %v561 = vand.u32 %v560, 4294901760
        %562 = vmatpush1.msra.mxu0 %v561
        %563 = vmatprep.subr.mxu0 0.0
        %v564 = vand.u32 %v253, 4294901760
        %v565 = vsub.f32 %v253, %v564
        %v566 = vand.u32 %v565, 4294901760
        %v567 = vsub.f32 %v565, %v566
        %v568 = vand.u32 %v567, 4294901760
        %569 = vmatpush1.msra.mxu0 %v568
        %570 = vmatprep.subr.mxu0 0.0
        %v571 = vand.u32 %v254, 4294901760
        %v572 = vsub.f32 %v254, %v571
        %v573 = vand.u32 %v572, 4294901760
        %v574 = vsub.f32 %v572, %v573
        %v575 = vand.u32 %v574, 4294901760
        %576 = vmatpush1.msra.mxu0 %v575
        %577 = vmatprep.subr.mxu0 0.0
        %v578 = vand.u32 %v255, 4294901760
        %v579 = vsub.f32 %v255, %v578
        %v580 = vand.u32 %v579, 4294901760
        %v581 = vsub.f32 %v579, %v580
        %v582 = vand.u32 %v581, 4294901760
        %583 = vmatpush1.msra.mxu0 %v582
        %584 = vmatprep.subr.mxu0 0.0
        %v585 = vand.u32 %v256, 4294901760
        %v586 = vsub.f32 %v256, %v585
        %v587 = vand.u32 %v586, 4294901760
        %v588 = vsub.f32 %v586, %v587
        %v589 = vand.u32 %v588, 4294901760
        %590 = vmatpush1.msra.mxu0 %v589
        %591 = vmatprep.subr.mxu0 0.0
        %v592 = vand.u32 %v257, 4294901760
        %v593 = vsub.f32 %v257, %v592
        %v594 = vand.u32 %v593, 4294901760
        %v595 = vsub.f32 %v593, %v594
        %v596 = vand.u32 %v595, 4294901760
        %597 = vmatpush1.msra.mxu0 %v596
        %598 = vmatprep.subr.mxu0 0.0
        %v599 = vand.u32 %v258, 4294901760
        %v600 = vsub.f32 %v258, %v599
        %v601 = vand.u32 %v600, 4294901760
        %v602 = vsub.f32 %v600, %v601
        %v603 = vand.u32 %v602, 4294901760
        %604 = vmatpush1.msra.mxu0 %v603
        %605 = vmatprep.subr.mxu0 0.0
        %v606 = vand.u32 %v259, 4294901760
        %v607 = vsub.f32 %v259, %v606
        %v608 = vand.u32 %v607, 4294901760
        %v609 = vsub.f32 %v607, %v608
        %v610 = vand.u32 %v609, 4294901760
        %611 = vmatpush1.msra.mxu0 %v610
        %v612 = vand.u32 %v226, 4294901760
        %613 = vmatprep.mubr.f32.mxu0 %v612
        %v614 = vand.u32 %v225, 4294901760
        %615 = vmatmul.mubr.f32.gmra.mrb[0].mxu0 %v614
        %v616 = vpop.f32.mrb[0].mxu0
        %v617 = vadd.f32 %v385, %v616
        %v618 = vpop.f32.mrb[0].mxu0
        %619 = vdwg.mxu0
        %620 = vmatprep.subr.mxu0 0.0
        %v621 = vand.u32 %v228, 4294901760
        %v622 = vsub.f32 %v228, %v621
        %623 = vmatpush1.msra.mxu0 %v622
        %624 = vmatprep.subr.mxu0 0.0
        %v625 = vand.u32 %v229, 4294901760
        %v626 = vsub.f32 %v229, %v625
        %627 = vmatpush1.msra.mxu0 %v626
        %628 = vmatprep.subr.mxu0 0.0
        %v629 = vand.u32 %v230, 4294901760
        %v630 = vsub.f32 %v230, %v629
        %631 = vmatpush1.msra.mxu0 %v630
        %632 = vmatprep.subr.mxu0 0.0
        %v633 = vand.u32 %v231, 4294901760
        %v634 = vsub.f32 %v231, %v633
        %635 = vmatpush1.msra.mxu0 %v634
        %636 = vmatprep.subr.mxu0 0.0
        %v637 = vand.u32 %v232, 4294901760
        %v638 = vsub.f32 %v232, %v637
        %639 = vmatpush1.msra.mxu0 %v638
        %640 = vmatprep.subr.mxu0 0.0
        %v641 = vand.u32 %v233, 4294901760
        %v642 = vsub.f32 %v233, %v641
        %643 = vmatpush1.msra.mxu0 %v642
        %644 = vmatprep.subr.mxu0 0.0
        %v645 = vand.u32 %v234, 4294901760
        %v646 = vsub.f32 %v234, %v645
        %647 = vmatpush1.msra.mxu0 %v646
        %648 = vmatprep.subr.mxu0 0.0
        %v649 = vand.u32 %v235, 4294901760
        %v650 = vsub.f32 %v235, %v649
        %651 = vmatpush1.msra.mxu0 %v650
        %652 = vmatprep.subr.mxu0 0.0
        %v653 = vand.u32 %v236, 4294901760
        %v654 = vsub.f32 %v236, %v653
        %655 = vmatpush1.msra.mxu0 %v654
        %656 = vmatprep.subr.mxu0 0.0
        %v657 = vand.u32 %v237, 4294901760
        %v658 = vsub.f32 %v237, %v657
        %659 = vmatpush1.msra.mxu0 %v658
        %660 = vmatprep.subr.mxu0 0.0
        %v661 = vand.u32 %v238, 4294901760
        %v662 = vsub.f32 %v238, %v661
        %663 = vmatpush1.msra.mxu0 %v662
        %664 = vmatprep.subr.mxu0 0.0
        %v665 = vand.u32 %v239, 4294901760
        %v666 = vsub.f32 %v239, %v665
        %667 = vmatpush1.msra.mxu0 %v666
        %668 = vmatprep.subr.mxu0 0.0
        %v669 = vand.u32 %v240, 4294901760
        %v670 = vsub.f32 %v240, %v669
        %671 = vmatpush1.msra.mxu0 %v670
        %672 = vmatprep.subr.mxu0 0.0
        %v673 = vand.u32 %v241, 4294901760
        %v674 = vsub.f32 %v241, %v673
        %675 = vmatpush1.msra.mxu0 %v674
        %676 = vmatprep.subr.mxu0 0.0
        %v677 = vand.u32 %v242, 4294901760
        %v678 = vsub.f32 %v242, %v677
        %679 = vmatpush1.msra.mxu0 %v678
        %680 = vmatprep.subr.mxu0 0.0
        %v681 = vand.u32 %v243, 4294901760
        %v682 = vsub.f32 %v243, %v681
        %683 = vmatpush1.msra.mxu0 %v682
        %684 = vmatprep.subr.mxu0 0.0
        %v685 = vand.u32 %v244, 4294901760
        %v686 = vsub.f32 %v244, %v685
        %687 = vmatpush1.msra.mxu0 %v686
        %688 = vmatprep.subr.mxu0 0.0
        %v689 = vand.u32 %v245, 4294901760
        %v690 = vsub.f32 %v245, %v689
        %691 = vmatpush1.msra.mxu0 %v690
        %692 = vmatprep.subr.mxu0 0.0
        %v693 = vand.u32 %v246, 4294901760
        %v694 = vsub.f32 %v246, %v693
        %695 = vmatpush1.msra.mxu0 %v694
        %696 = vmatprep.subr.mxu0 0.0
        %v697 = vand.u32 %v247, 4294901760
        %v698 = vsub.f32 %v247, %v697
        %699 = vmatpush1.msra.mxu0 %v698
        %700 = vmatprep.subr.mxu0 0.0
        %v701 = vand.u32 %v248, 4294901760
        %v702 = vsub.f32 %v248, %v701
        %703 = vmatpush1.msra.mxu0 %v702
        %704 = vmatprep.subr.mxu0 0.0
        %v705 = vand.u32 %v249, 4294901760
        %v706 = vsub.f32 %v249, %v705
        %707 = vmatpush1.msra.mxu0 %v706
        %708 = vmatprep.subr.mxu0 0.0
        %v709 = vand.u32 %v250, 4294901760
        %v710 = vsub.f32 %v250, %v709
        %711 = vmatpush1.msra.mxu0 %v710
        %712 = vmatprep.subr.mxu0 0.0
        %v713 = vand.u32 %v251, 4294901760
        %v714 = vsub.f32 %v251, %v713
        %715 = vmatpush1.msra.mxu0 %v714
        %716 = vmatprep.subr.mxu0 0.0
        %v717 = vand.u32 %v252, 4294901760
        %v718 = vsub.f32 %v252, %v717
        %719 = vmatpush1.msra.mxu0 %v718
        %720 = vmatprep.subr.mxu0 0.0
        %v721 = vand.u32 %v253, 4294901760
        %v722 = vsub.f32 %v253, %v721
        %723 = vmatpush1.msra.mxu0 %v722
        %724 = vmatprep.subr.mxu0 0.0
        %v725 = vand.u32 %v254, 4294901760
        %v726 = vsub.f32 %v254, %v725
        %727 = vmatpush1.msra.mxu0 %v726
        %728 = vmatprep.subr.mxu0 0.0
        %v729 = vand.u32 %v255, 4294901760
        %v730 = vsub.f32 %v255, %v729
        %731 = vmatpush1.msra.mxu0 %v730
        %732 = vmatprep.subr.mxu0 0.0
        %v733 = vand.u32 %v256, 4294901760
        %v734 = vsub.f32 %v256, %v733
        %735 = vmatpush1.msra.mxu0 %v734
        %736 = vmatprep.subr.mxu0 0.0
        %v737 = vand.u32 %v257, 4294901760
        %v738 = vsub.f32 %v257, %v737
        %739 = vmatpush1.msra.mxu0 %v738
        %740 = vmatprep.subr.mxu0 0.0
        %v741 = vand.u32 %v258, 4294901760
        %v742 = vsub.f32 %v258, %v741
        %743 = vmatpush1.msra.mxu0 %v742
        %744 = vmatprep.subr.mxu0 0.0
        %v745 = vand.u32 %v259, 4294901760
        %v746 = vsub.f32 %v259, %v745
        %747 = vmatpush1.msra.mxu0 %v746
        %v748 = vand.u32 %v226, 4294901760
        %v749 = vsub.f32 %v226, %v748
        %750 = vmatprep.mubr.f32.mxu0 %v749
        %v751 = vand.u32 %v225, 4294901760
        %v752 = vsub.f32 %v225, %v751
        %753 = vmatmul.mubr.f32.gmra.mrb[0].mxu0 %v752
        %v754 = vpop.f32.mrb[0].mxu0
        %v755 = vadd.f32 %v617, %v754
        %v756 = vpop.f32.mrb[0].mxu0
        %757 = vdwg.mxu0
        %758 = vmatprep.subr.mxu0 0.0
        %v759 = vand.u32 %v228, 4294901760
        %760 = vmatpush1.msra.mxu0 %v759
        %761 = vmatprep.subr.mxu0 0.0
        %v762 = vand.u32 %v229, 4294901760
        %763 = vmatpush1.msra.mxu0 %v762
        %764 = vmatprep.subr.mxu0 0.0
        %v765 = vand.u32 %v230, 4294901760
        %766 = vmatpush1.msra.mxu0 %v765
        %767 = vmatprep.subr.mxu0 0.0
        %v768 = vand.u32 %v231, 4294901760
        %769 = vmatpush1.msra.mxu0 %v768
        %770 = vmatprep.subr.mxu0 0.0
        %v771 = vand.u32 %v232, 4294901760
        %772 = vmatpush1.msra.mxu0 %v771
        %773 = vmatprep.subr.mxu0 0.0
        %v774 = vand.u32 %v233, 4294901760
        %775 = vmatpush1.msra.mxu0 %v774
        %776 = vmatprep.subr.mxu0 0.0
        %v777 = vand.u32 %v234, 4294901760
        %778 = vmatpush1.msra.mxu0 %v777
        %779 = vmatprep.subr.mxu0 0.0
        %v780 = vand.u32 %v235, 4294901760
        %781 = vmatpush1.msra.mxu0 %v780
        %782 = vmatprep.subr.mxu0 0.0
        %v783 = vand.u32 %v236, 4294901760
        %784 = vmatpush1.msra.mxu0 %v783
        %785 = vmatprep.subr.mxu0 0.0
        %v786 = vand.u32 %v237, 4294901760
        %787 = vmatpush1.msra.mxu0 %v786
        %788 = vmatprep.subr.mxu0 0.0
        %v789 = vand.u32 %v238, 4294901760
        %790 = vmatpush1.msra.mxu0 %v789
        %791 = vmatprep.subr.mxu0 0.0
        %v792 = vand.u32 %v239, 4294901760
        %793 = vmatpush1.msra.mxu0 %v792
        %794 = vmatprep.subr.mxu0 0.0
        %v795 = vand.u32 %v240, 4294901760
        %796 = vmatpush1.msra.mxu0 %v795
        %797 = vmatprep.subr.mxu0 0.0
        %v798 = vand.u32 %v241, 4294901760
        %799 = vmatpush1.msra.mxu0 %v798
        %800 = vmatprep.subr.mxu0 0.0
        %v801 = vand.u32 %v242, 4294901760
        %802 = vmatpush1.msra.mxu0 %v801
        %803 = vmatprep.subr.mxu0 0.0
        %v804 = vand.u32 %v243, 4294901760
        %805 = vmatpush1.msra.mxu0 %v804
        %806 = vmatprep.subr.mxu0 0.0
        %v807 = vand.u32 %v244, 4294901760
        %808 = vmatpush1.msra.mxu0 %v807
        %809 = vmatprep.subr.mxu0 0.0
        %v810 = vand.u32 %v245, 4294901760
        %811 = vmatpush1.msra.mxu0 %v810
        %812 = vmatprep.subr.mxu0 0.0
        %v813 = vand.u32 %v246, 4294901760
        %814 = vmatpush1.msra.mxu0 %v813
        %815 = vmatprep.subr.mxu0 0.0
        %v816 = vand.u32 %v247, 4294901760
        %817 = vmatpush1.msra.mxu0 %v816
        %818 = vmatprep.subr.mxu0 0.0
        %v819 = vand.u32 %v248, 4294901760
        %820 = vmatpush1.msra.mxu0 %v819
        %821 = vmatprep.subr.mxu0 0.0
        %v822 = vand.u32 %v249, 4294901760
        %823 = vmatpush1.msra.mxu0 %v822
        %824 = vmatprep.subr.mxu0 0.0
        %v825 = vand.u32 %v250, 4294901760
        %826 = vmatpush1.msra.mxu0 %v825
        %827 = vmatprep.subr.mxu0 0.0
        %v828 = vand.u32 %v251, 4294901760
        %829 = vmatpush1.msra.mxu0 %v828
        %830 = vmatprep.subr.mxu0 0.0
        %v831 = vand.u32 %v252, 4294901760
        %832 = vmatpush1.msra.mxu0 %v831
        %833 = vmatprep.subr.mxu0 0.0
        %v834 = vand.u32 %v253, 4294901760
        %835 = vmatpush1.msra.mxu0 %v834
        %836 = vmatprep.subr.mxu0 0.0
        %v837 = vand.u32 %v254, 4294901760
        %838 = vmatpush1.msra.mxu0 %v837
        %839 = vmatprep.subr.mxu0 0.0
        %v840 = vand.u32 %v255, 4294901760
        %841 = vmatpush1.msra.mxu0 %v840
        %842 = vmatprep.subr.mxu0 0.0
        %v843 = vand.u32 %v256, 4294901760
        %844 = vmatpush1.msra.mxu0 %v843
        %845 = vmatprep.subr.mxu0 0.0
        %v846 = vand.u32 %v257, 4294901760
        %847 = vmatpush1.msra.mxu0 %v846
        %848 = vmatprep.subr.mxu0 0.0
        %v849 = vand.u32 %v258, 4294901760
        %850 = vmatpush1.msra.mxu0 %v849
        %851 = vmatprep.subr.mxu0 0.0
        %v852 = vand.u32 %v259, 4294901760
        %853 = vmatpush1.msra.mxu0 %v852
        %v854 = vand.u32 %v226, 4294901760
        %v855 = vsub.f32 %v226, %v854
        %v856 = vand.u32 %v855, 4294901760
        %857 = vmatprep.mubr.f32.mxu0 %v856
        %v858 = vand.u32 %v225, 4294901760
        %v859 = vsub.f32 %v225, %v858
        %v860 = vand.u32 %v859, 4294901760
        %861 = vmatmul.mubr.f32.gmra.mrb[0].mxu0 %v860
        %v862 = vpop.f32.mrb[0].mxu0
        %v863 = vadd.f32 %v755, %v862
        %v864 = vpop.f32.mrb[0].mxu0
        %865 = vdwg.mxu0
        %866 = vmatprep.subr.mxu0 0.0
        %v867 = vand.u32 %v228, 4294901760
        %v868 = vsub.f32 %v228, %v867
        %v869 = vand.u32 %v868, 4294901760
        %870 = vmatpush1.msra.mxu0 %v869
        %871 = vmatprep.subr.mxu0 0.0
        %v872 = vand.u32 %v229, 4294901760
        %v873 = vsub.f32 %v229, %v872
        %v874 = vand.u32 %v873, 4294901760
        %875 = vmatpush1.msra.mxu0 %v874
        %876 = vmatprep.subr.mxu0 0.0
        %v877 = vand.u32 %v230, 4294901760
        %v878 = vsub.f32 %v230, %v877
        %v879 = vand.u32 %v878, 4294901760
        %880 = vmatpush1.msra.mxu0 %v879
        %881 = vmatprep.subr.mxu0 0.0
        %v882 = vand.u32 %v231, 4294901760
        %v883 = vsub.f32 %v231, %v882
        %v884 = vand.u32 %v883, 4294901760
        %885 = vmatpush1.msra.mxu0 %v884
        %886 = vmatprep.subr.mxu0 0.0
        %v887 = vand.u32 %v232, 4294901760
        %v888 = vsub.f32 %v232, %v887
        %v889 = vand.u32 %v888, 4294901760
        %890 = vmatpush1.msra.mxu0 %v889
        %891 = vmatprep.subr.mxu0 0.0
        %v892 = vand.u32 %v233, 4294901760
        %v893 = vsub.f32 %v233, %v892
        %v894 = vand.u32 %v893, 4294901760
        %895 = vmatpush1.msra.mxu0 %v894
        %896 = vmatprep.subr.mxu0 0.0
        %v897 = vand.u32 %v234, 4294901760
        %v898 = vsub.f32 %v234, %v897
        %v899 = vand.u32 %v898, 4294901760
        %900 = vmatpush1.msra.mxu0 %v899
        %901 = vmatprep.subr.mxu0 0.0
        %v902 = vand.u32 %v235, 4294901760
        %v903 = vsub.f32 %v235, %v902
        %v904 = vand.u32 %v903, 4294901760
        %905 = vmatpush1.msra.mxu0 %v904
        %906 = vmatprep.subr.mxu0 0.0
        %v907 = vand.u32 %v236, 4294901760
        %v908 = vsub.f32 %v236, %v907
        %v909 = vand.u32 %v908, 4294901760
        %910 = vmatpush1.msra.mxu0 %v909
        %911 = vmatprep.subr.mxu0 0.0
        %v912 = vand.u32 %v237, 4294901760
        %v913 = vsub.f32 %v237, %v912
        %v914 = vand.u32 %v913, 4294901760
        %915 = vmatpush1.msra.mxu0 %v914
        %916 = vmatprep.subr.mxu0 0.0
        %v917 = vand.u32 %v238, 4294901760
        %v918 = vsub.f32 %v238, %v917
        %v919 = vand.u32 %v918, 4294901760
        %920 = vmatpush1.msra.mxu0 %v919
        %921 = vmatprep.subr.mxu0 0.0
        %v922 = vand.u32 %v239, 4294901760
        %v923 = vsub.f32 %v239, %v922
        %v924 = vand.u32 %v923, 4294901760
        %925 = vmatpush1.msra.mxu0 %v924
        %926 = vmatprep.subr.mxu0 0.0
        %v927 = vand.u32 %v240, 4294901760
        %v928 = vsub.f32 %v240, %v927
        %v929 = vand.u32 %v928, 4294901760
        %930 = vmatpush1.msra.mxu0 %v929
        %931 = vmatprep.subr.mxu0 0.0
        %v932 = vand.u32 %v241, 4294901760
        %v933 = vsub.f32 %v241, %v932
        %v934 = vand.u32 %v933, 4294901760
        %935 = vmatpush1.msra.mxu0 %v934
        %936 = vmatprep.subr.mxu0 0.0
        %v937 = vand.u32 %v242, 4294901760
        %v938 = vsub.f32 %v242, %v937
        %v939 = vand.u32 %v938, 4294901760
        %940 = vmatpush1.msra.mxu0 %v939
        %941 = vmatprep.subr.mxu0 0.0
        %v942 = vand.u32 %v243, 4294901760
        %v943 = vsub.f32 %v243, %v942
        %v944 = vand.u32 %v943, 4294901760
        %945 = vmatpush1.msra.mxu0 %v944
        %946 = vmatprep.subr.mxu0 0.0
        %v947 = vand.u32 %v244, 4294901760
        %v948 = vsub.f32 %v244, %v947
        %v949 = vand.u32 %v948, 4294901760
        %950 = vmatpush1.msra.mxu0 %v949
        %951 = vmatprep.subr.mxu0 0.0
        %v952 = vand.u32 %v245, 4294901760
        %v953 = vsub.f32 %v245, %v952
        %v954 = vand.u32 %v953, 4294901760
        %955 = vmatpush1.msra.mxu0 %v954
        %956 = vmatprep.subr.mxu0 0.0
        %v957 = vand.u32 %v246, 4294901760
        %v958 = vsub.f32 %v246, %v957
        %v959 = vand.u32 %v958, 4294901760
        %960 = vmatpush1.msra.mxu0 %v959
        %961 = vmatprep.subr.mxu0 0.0
        %v962 = vand.u32 %v247, 4294901760
        %v963 = vsub.f32 %v247, %v962
        %v964 = vand.u32 %v963, 4294901760
        %965 = vmatpush1.msra.mxu0 %v964
        %966 = vmatprep.subr.mxu0 0.0
        %v967 = vand.u32 %v248, 4294901760
        %v968 = vsub.f32 %v248, %v967
        %v969 = vand.u32 %v968, 4294901760
        %970 = vmatpush1.msra.mxu0 %v969
        %971 = vmatprep.subr.mxu0 0.0
        %v972 = vand.u32 %v249, 4294901760
        %v973 = vsub.f32 %v249, %v972
        %v974 = vand.u32 %v973, 4294901760
        %975 = vmatpush1.msra.mxu0 %v974
        %976 = vmatprep.subr.mxu0 0.0
        %v977 = vand.u32 %v250, 4294901760
        %v978 = vsub.f32 %v250, %v977
        %v979 = vand.u32 %v978, 4294901760
        %980 = vmatpush1.msra.mxu0 %v979
        %981 = vmatprep.subr.mxu0 0.0
        %v982 = vand.u32 %v251, 4294901760
        %v983 = vsub.f32 %v251, %v982
        %v984 = vand.u32 %v983, 4294901760
        %985 = vmatpush1.msra.mxu0 %v984
        %986 = vmatprep.subr.mxu0 0.0
        %v987 = vand.u32 %v252, 4294901760
        %v988 = vsub.f32 %v252, %v987
        %v989 = vand.u32 %v988, 4294901760
        %990 = vmatpush1.msra.mxu0 %v989
        %991 = vmatprep.subr.mxu0 0.0
        %v992 = vand.u32 %v253, 4294901760
        %v993 = vsub.f32 %v253, %v992
        %v994 = vand.u32 %v993, 4294901760
        %995 = vmatpush1.msra.mxu0 %v994
        %996 = vmatprep.subr.mxu0 0.0
        %v997 = vand.u32 %v254, 4294901760
        %v998 = vsub.f32 %v254, %v997
        %v999 = vand.u32 %v998, 4294901760
        %1000 = vmatpush1.msra.mxu0 %v999
        %1001 = vmatprep.subr.mxu0 0.0
        %v1002 = vand.u32 %v255, 4294901760
        %v1003 = vsub.f32 %v255, %v1002
        %v1004 = vand.u32 %v1003, 4294901760
        %1005 = vmatpush1.msra.mxu0 %v1004
        %1006 = vmatprep.subr.mxu0 0.0
        %v1007 = vand.u32 %v256, 4294901760
        %v1008 = vsub.f32 %v256, %v1007
        %v1009 = vand.u32 %v1008, 4294901760
        %1010 = vmatpush1.msra.mxu0 %v1009
        %1011 = vmatprep.subr.mxu0 0.0
        %v1012 = vand.u32 %v257, 4294901760
        %v1013 = vsub.f32 %v257, %v1012
        %v1014 = vand.u32 %v1013, 4294901760
        %1015 = vmatpush1.msra.mxu0 %v1014
        %1016 = vmatprep.subr.mxu0 0.0
        %v1017 = vand.u32 %v258, 4294901760
        %v1018 = vsub.f32 %v258, %v1017
        %v1019 = vand.u32 %v1018, 4294901760
        %1020 = vmatpush1.msra.mxu0 %v1019
        %1021 = vmatprep.subr.mxu0 0.0
        %v1022 = vand.u32 %v259, 4294901760
        %v1023 = vsub.f32 %v259, %v1022
        %v1024 = vand.u32 %v1023, 4294901760
        %1025 = vmatpush1.msra.mxu0 %v1024
        %v1026 = vand.u32 %v226, 4294901760
        %1027 = vmatprep.mubr.f32.mxu0 %v1026
        %v1028 = vand.u32 %v225, 4294901760
        %1029 = vmatmul.mubr.f32.gmra.mrb[0].mxu0 %v1028
        %v1030 = vpop.f32.mrb[0].mxu0
        %v1031 = vadd.f32 %v863, %v1030
        %v1032 = vpop.f32.mrb[0].mxu0
        %1033 = vdwg.mxu0
        %1034 = vmatprep.subr.mxu0 0.0
        %v1035 = vand.u32 %v228, 4294901760
        %1036 = vmatpush1.msra.mxu0 %v1035
        %1037 = vmatprep.subr.mxu0 0.0
        %v1038 = vand.u32 %v229, 4294901760
        %1039 = vmatpush1.msra.mxu0 %v1038
        %1040 = vmatprep.subr.mxu0 0.0
        %v1041 = vand.u32 %v230, 4294901760
        %1042 = vmatpush1.msra.mxu0 %v1041
        %1043 = vmatprep.subr.mxu0 0.0
        %v1044 = vand.u32 %v231, 4294901760
        %1045 = vmatpush1.msra.mxu0 %v1044
        %1046 = vmatprep.subr.mxu0 0.0
        %v1047 = vand.u32 %v232, 4294901760
        %1048 = vmatpush1.msra.mxu0 %v1047
        %1049 = vmatprep.subr.mxu0 0.0
        %v1050 = vand.u32 %v233, 4294901760
        %1051 = vmatpush1.msra.mxu0 %v1050
        %1052 = vmatprep.subr.mxu0 0.0
        %v1053 = vand.u32 %v234, 4294901760
        %1054 = vmatpush1.msra.mxu0 %v1053
        %1055 = vmatprep.subr.mxu0 0.0
        %v1056 = vand.u32 %v235, 4294901760
        %1057 = vmatpush1.msra.mxu0 %v1056
        %1058 = vmatprep.subr.mxu0 0.0
        %v1059 = vand.u32 %v236, 4294901760
        %1060 = vmatpush1.msra.mxu0 %v1059
        %1061 = vmatprep.subr.mxu0 0.0
        %v1062 = vand.u32 %v237, 4294901760
        %1063 = vmatpush1.msra.mxu0 %v1062
        %1064 = vmatprep.subr.mxu0 0.0
        %v1065 = vand.u32 %v238, 4294901760
        %1066 = vmatpush1.msra.mxu0 %v1065
        %1067 = vmatprep.subr.mxu0 0.0
        %v1068 = vand.u32 %v239, 4294901760
        %1069 = vmatpush1.msra.mxu0 %v1068
        %1070 = vmatprep.subr.mxu0 0.0
        %v1071 = vand.u32 %v240, 4294901760
        %1072 = vmatpush1.msra.mxu0 %v1071
        %1073 = vmatprep.subr.mxu0 0.0
        %v1074 = vand.u32 %v241, 4294901760
        %1075 = vmatpush1.msra.mxu0 %v1074
        %1076 = vmatprep.subr.mxu0 0.0
        %v1077 = vand.u32 %v242, 4294901760
        %1078 = vmatpush1.msra.mxu0 %v1077
        %1079 = vmatprep.subr.mxu0 0.0
        %v1080 = vand.u32 %v243, 4294901760
        %1081 = vmatpush1.msra.mxu0 %v1080
        %1082 = vmatprep.subr.mxu0 0.0
        %v1083 = vand.u32 %v244, 4294901760
        %1084 = vmatpush1.msra.mxu0 %v1083
        %1085 = vmatprep.subr.mxu0 0.0
        %v1086 = vand.u32 %v245, 4294901760
        %1087 = vmatpush1.msra.mxu0 %v1086
        %1088 = vmatprep.subr.mxu0 0.0
        %v1089 = vand.u32 %v246, 4294901760
        %1090 = vmatpush1.msra.mxu0 %v1089
        %1091 = vmatprep.subr.mxu0 0.0
        %v1092 = vand.u32 %v247, 4294901760
        %1093 = vmatpush1.msra.mxu0 %v1092
        %1094 = vmatprep.subr.mxu0 0.0
        %v1095 = vand.u32 %v248, 4294901760
        %1096 = vmatpush1.msra.mxu0 %v1095
        %1097 = vmatprep.subr.mxu0 0.0
        %v1098 = vand.u32 %v249, 4294901760
        %1099 = vmatpush1.msra.mxu0 %v1098
        %1100 = vmatprep.subr.mxu0 0.0
        %v1101 = vand.u32 %v250, 4294901760
        %1102 = vmatpush1.msra.mxu0 %v1101
        %1103 = vmatprep.subr.mxu0 0.0
        %v1104 = vand.u32 %v251, 4294901760
        %1105 = vmatpush1.msra.mxu0 %v1104
        %1106 = vmatprep.subr.mxu0 0.0
        %v1107 = vand.u32 %v252, 4294901760
        %1108 = vmatpush1.msra.mxu0 %v1107
        %1109 = vmatprep.subr.mxu0 0.0
        %v1110 = vand.u32 %v253, 4294901760
        %1111 = vmatpush1.msra.mxu0 %v1110
        %1112 = vmatprep.subr.mxu0 0.0
        %v1113 = vand.u32 %v254, 4294901760
        %1114 = vmatpush1.msra.mxu0 %v1113
        %1115 = vmatprep.subr.mxu0 0.0
        %v1116 = vand.u32 %v255, 4294901760
        %1117 = vmatpush1.msra.mxu0 %v1116
        %1118 = vmatprep.subr.mxu0 0.0
        %v1119 = vand.u32 %v256, 4294901760
        %1120 = vmatpush1.msra.mxu0 %v1119
        %1121 = vmatprep.subr.mxu0 0.0
        %v1122 = vand.u32 %v257, 4294901760
        %1123 = vmatpush1.msra.mxu0 %v1122
        %1124 = vmatprep.subr.mxu0 0.0
        %v1125 = vand.u32 %v258, 4294901760
        %1126 = vmatpush1.msra.mxu0 %v1125
        %1127 = vmatprep.subr.mxu0 0.0
        %v1128 = vand.u32 %v259, 4294901760
        %1129 = vmatpush1.msra.mxu0 %v1128
        %v1130 = vand.u32 %v226, 4294901760
        %1131 = vmatprep.mubr.f32.mxu0 %v1130
        %v1132 = vand.u32 %v225, 4294901760
        %1133 = vmatmul.mubr.f32.gmra.mrb[0].mxu0 %v1132
        %v1134 = vpop.f32.mrb[0].mxu0
        %v1135 = vadd.f32 %v1031, %v1134
        %v1136 = vpop.f32.mrb[0].mxu0
        %1137 = vdwg.mxu0
        %1138 = vmatprep.subr.mxu0 0.0
        %v1139 = vand.u32 %v260, 4294901760
        %1140 = vmatpush1.msra.mxu0 %v1139
        %1141 = vmatprep.subr.mxu0 0.0
        %v1142 = vand.u32 %v261, 4294901760
        %1143 = vmatpush1.msra.mxu0 %v1142
        %1144 = vmatprep.subr.mxu0 0.0
        %v1145 = vand.u32 %v262, 4294901760
        %1146 = vmatpush1.msra.mxu0 %v1145
        %1147 = vmatprep.subr.mxu0 0.0
        %v1148 = vand.u32 %v263, 4294901760
        %1149 = vmatpush1.msra.mxu0 %v1148
        %1150 = vmatprep.subr.mxu0 0.0
        %v1151 = vand.u32 %v264, 4294901760
        %1152 = vmatpush1.msra.mxu0 %v1151
        %1153 = vmatprep.subr.mxu0 0.0
        %v1154 = vand.u32 %v265, 4294901760
        %1155 = vmatpush1.msra.mxu0 %v1154
        %1156 = vmatprep.subr.mxu0 0.0
        %v1157 = vand.u32 %v266, 4294901760
        %1158 = vmatpush1.msra.mxu0 %v1157
        %1159 = vmatprep.subr.mxu0 0.0
        %v1160 = vand.u32 %v267, 4294901760
        %1161 = vmatpush1.msra.mxu0 %v1160
        %1162 = vmatprep.subr.mxu0 0.0
        %v1163 = vand.u32 %v268, 4294901760
        %1164 = vmatpush1.msra.mxu0 %v1163
        %1165 = vmatprep.subr.mxu0 0.0
        %v1166 = vand.u32 %v269, 4294901760
        %1167 = vmatpush1.msra.mxu0 %v1166
        %1168 = vmatprep.subr.mxu0 0.0
        %v1169 = vand.u32 %v270, 4294901760
        %1170 = vmatpush1.msra.mxu0 %v1169
        %1171 = vmatprep.subr.mxu0 0.0
        %v1172 = vand.u32 %v271, 4294901760
        %1173 = vmatpush1.msra.mxu0 %v1172
        %1174 = vmatprep.subr.mxu0 0.0
        %v1175 = vand.u32 %v272, 4294901760
        %1176 = vmatpush1.msra.mxu0 %v1175
        %1177 = vmatprep.subr.mxu0 0.0
        %v1178 = vand.u32 %v273, 4294901760
        %1179 = vmatpush1.msra.mxu0 %v1178
        %1180 = vmatprep.subr.mxu0 0.0
        %v1181 = vand.u32 %v274, 4294901760
        %1182 = vmatpush1.msra.mxu0 %v1181
        %1183 = vmatprep.subr.mxu0 0.0
        %v1184 = vand.u32 %v275, 4294901760
        %1185 = vmatpush1.msra.mxu0 %v1184
        %1186 = vmatprep.subr.mxu0 0.0
        %1187 = vmatpush1.msra.mxu0 0.0
        %1188 = vmatprep.subr.mxu0 0.0
        %1189 = vmatpush1.msra.mxu0 0.0
        %1190 = vmatprep.subr.mxu0 0.0
        %1191 = vmatpush1.msra.mxu0 0.0
        %1192 = vmatprep.subr.mxu0 0.0
        %1193 = vmatpush1.msra.mxu0 0.0
        %1194 = vmatprep.subr.mxu0 0.0
        %1195 = vmatpush1.msra.mxu0 0.0
        %1196 = vmatprep.subr.mxu0 0.0
        %1197 = vmatpush1.msra.mxu0 0.0
        %1198 = vmatprep.subr.mxu0 0.0
        %1199 = vmatpush1.msra.mxu0 0.0
        %1200 = vmatprep.subr.mxu0 0.0
        %1201 = vmatpush1.msra.mxu0 0.0
        %1202 = vmatprep.subr.mxu0 0.0
        %1203 = vmatpush1.msra.mxu0 0.0
        %1204 = vmatprep.subr.mxu0 0.0
        %1205 = vmatpush1.msra.mxu0 0.0
        %1206 = vmatprep.subr.mxu0 0.0
        %1207 = vmatpush1.msra.mxu0 0.0
        %1208 = vmatprep.subr.mxu0 0.0
        %1209 = vmatpush1.msra.mxu0 0.0
        %1210 = vmatprep.subr.mxu0 0.0
        %1211 = vmatpush1.msra.mxu0 0.0
        %1212 = vmatprep.subr.mxu0 0.0
        %1213 = vmatpush1.msra.mxu0 0.0
        %1214 = vmatprep.subr.mxu0 0.0
        %1215 = vmatpush1.msra.mxu0 0.0
        %1216 = vmatprep.subr.mxu0 0.0
        %1217 = vmatpush1.msra.mxu0 0.0
        %1218 = vmatprep.mubr.f32.mxu0 0.0
        %v1219 = vand.u32 %v227, 4294901760
        %v1220 = vsub.f32 %v227, %v1219
        %v1221 = vand.u32 %v1220, 4294901760
        %v1222 = vsub.f32 %v1220, %v1221
        %v1223 = vand.u32 %v1222, 4294901760
        %1224 = vmatmul.mubr.f32.gmra.mrb[0].mxu0 %v1223
        %v1225 = vpop.f32.mrb[0].mxu0
        %v1226 = vadd.f32 %v1135, %v1225
        %v1227 = vpop.f32.mrb[0].mxu0
        %1228 = vdwg.mxu0
        %1229 = vmatprep.subr.mxu0 0.0
        %v1230 = vand.u32 %v260, 4294901760
        %v1231 = vsub.f32 %v260, %v1230
        %v1232 = vand.u32 %v1231, 4294901760
        %v1233 = vsub.f32 %v1231, %v1232
        %v1234 = vand.u32 %v1233, 4294901760
        %1235 = vmatpush1.msra.mxu0 %v1234
        %1236 = vmatprep.subr.mxu0 0.0
        %v1237 = vand.u32 %v261, 4294901760
        %v1238 = vsub.f32 %v261, %v1237
        %v1239 = vand.u32 %v1238, 4294901760
        %v1240 = vsub.f32 %v1238, %v1239
        %v1241 = vand.u32 %v1240, 4294901760
        %1242 = vmatpush1.msra.mxu0 %v1241
        %1243 = vmatprep.subr.mxu0 0.0
        %v1244 = vand.u32 %v262, 4294901760
        %v1245 = vsub.f32 %v262, %v1244
        %v1246 = vand.u32 %v1245, 4294901760
        %v1247 = vsub.f32 %v1245, %v1246
        %v1248 = vand.u32 %v1247, 4294901760
        %1249 = vmatpush1.msra.mxu0 %v1248
        %1250 = vmatprep.subr.mxu0 0.0
        %v1251 = vand.u32 %v263, 4294901760
        %v1252 = vsub.f32 %v263, %v1251
        %v1253 = vand.u32 %v1252, 4294901760
        %v1254 = vsub.f32 %v1252, %v1253
        %v1255 = vand.u32 %v1254, 4294901760
        %1256 = vmatpush1.msra.mxu0 %v1255
        %1257 = vmatprep.subr.mxu0 0.0
        %v1258 = vand.u32 %v264, 4294901760
        %v1259 = vsub.f32 %v264, %v1258
        %v1260 = vand.u32 %v1259, 4294901760
        %v1261 = vsub.f32 %v1259, %v1260
        %v1262 = vand.u32 %v1261, 4294901760
        %1263 = vmatpush1.msra.mxu0 %v1262
        %1264 = vmatprep.subr.mxu0 0.0
        %v1265 = vand.u32 %v265, 4294901760
        %v1266 = vsub.f32 %v265, %v1265
        %v1267 = vand.u32 %v1266, 4294901760
        %v1268 = vsub.f32 %v1266, %v1267
        %v1269 = vand.u32 %v1268, 4294901760
        %1270 = vmatpush1.msra.mxu0 %v1269
        %1271 = vmatprep.subr.mxu0 0.0
        %v1272 = vand.u32 %v266, 4294901760
        %v1273 = vsub.f32 %v266, %v1272
        %v1274 = vand.u32 %v1273, 4294901760
        %v1275 = vsub.f32 %v1273, %v1274
        %v1276 = vand.u32 %v1275, 4294901760
        %1277 = vmatpush1.msra.mxu0 %v1276
        %1278 = vmatprep.subr.mxu0 0.0
        %v1279 = vand.u32 %v267, 4294901760
        %v1280 = vsub.f32 %v267, %v1279
        %v1281 = vand.u32 %v1280, 4294901760
        %v1282 = vsub.f32 %v1280, %v1281
        %v1283 = vand.u32 %v1282, 4294901760
        %1284 = vmatpush1.msra.mxu0 %v1283
        %1285 = vmatprep.subr.mxu0 0.0
        %v1286 = vand.u32 %v268, 4294901760
        %v1287 = vsub.f32 %v268, %v1286
        %v1288 = vand.u32 %v1287, 4294901760
        %v1289 = vsub.f32 %v1287, %v1288
        %v1290 = vand.u32 %v1289, 4294901760
        %1291 = vmatpush1.msra.mxu0 %v1290
        %1292 = vmatprep.subr.mxu0 0.0
        %v1293 = vand.u32 %v269, 4294901760
        %v1294 = vsub.f32 %v269, %v1293
        %v1295 = vand.u32 %v1294, 4294901760
        %v1296 = vsub.f32 %v1294, %v1295
        %v1297 = vand.u32 %v1296, 4294901760
        %1298 = vmatpush1.msra.mxu0 %v1297
        %1299 = vmatprep.subr.mxu0 0.0
        %v1300 = vand.u32 %v270, 4294901760
        %v1301 = vsub.f32 %v270, %v1300
        %v1302 = vand.u32 %v1301, 4294901760
        %v1303 = vsub.f32 %v1301, %v1302
        %v1304 = vand.u32 %v1303, 4294901760
        %1305 = vmatpush1.msra.mxu0 %v1304
        %1306 = vmatprep.subr.mxu0 0.0
        %v1307 = vand.u32 %v271, 4294901760
        %v1308 = vsub.f32 %v271, %v1307
        %v1309 = vand.u32 %v1308, 4294901760
        %v1310 = vsub.f32 %v1308, %v1309
        %v1311 = vand.u32 %v1310, 4294901760
        %1312 = vmatpush1.msra.mxu0 %v1311
        %1313 = vmatprep.subr.mxu0 0.0
        %v1314 = vand.u32 %v272, 4294901760
        %v1315 = vsub.f32 %v272, %v1314
        %v1316 = vand.u32 %v1315, 4294901760
        %v1317 = vsub.f32 %v1315, %v1316
        %v1318 = vand.u32 %v1317, 4294901760
        %1319 = vmatpush1.msra.mxu0 %v1318
        %1320 = vmatprep.subr.mxu0 0.0
        %v1321 = vand.u32 %v273, 4294901760
        %v1322 = vsub.f32 %v273, %v1321
        %v1323 = vand.u32 %v1322, 4294901760
        %v1324 = vsub.f32 %v1322, %v1323
        %v1325 = vand.u32 %v1324, 4294901760
        %1326 = vmatpush1.msra.mxu0 %v1325
        %1327 = vmatprep.subr.mxu0 0.0
        %v1328 = vand.u32 %v274, 4294901760
        %v1329 = vsub.f32 %v274, %v1328
        %v1330 = vand.u32 %v1329, 4294901760
        %v1331 = vsub.f32 %v1329, %v1330
        %v1332 = vand.u32 %v1331, 4294901760
        %1333 = vmatpush1.msra.mxu0 %v1332
        %1334 = vmatprep.subr.mxu0 0.0
        %v1335 = vand.u32 %v275, 4294901760
        %v1336 = vsub.f32 %v275, %v1335
        %v1337 = vand.u32 %v1336, 4294901760
        %v1338 = vsub.f32 %v1336, %v1337
        %v1339 = vand.u32 %v1338, 4294901760
        %1340 = vmatpush1.msra.mxu0 %v1339
        %1341 = vmatprep.subr.mxu0 0.0
        %1342 = vmatpush1.msra.mxu0 0.0
        %1343 = vmatprep.subr.mxu0 0.0
        %1344 = vmatpush1.msra.mxu0 0.0
        %1345 = vmatprep.subr.mxu0 0.0
        %1346 = vmatpush1.msra.mxu0 0.0
        %1347 = vmatprep.subr.mxu0 0.0
        %1348 = vmatpush1.msra.mxu0 0.0
        %1349 = vmatprep.subr.mxu0 0.0
        %1350 = vmatpush1.msra.mxu0 0.0
        %1351 = vmatprep.subr.mxu0 0.0
        %1352 = vmatpush1.msra.mxu0 0.0
        %1353 = vmatprep.subr.mxu0 0.0
        %1354 = vmatpush1.msra.mxu0 0.0
        %1355 = vmatprep.subr.mxu0 0.0
        %1356 = vmatpush1.msra.mxu0 0.0
        %1357 = vmatprep.subr.mxu0 0.0
        %1358 = vmatpush1.msra.mxu0 0.0
        %1359 = vmatprep.subr.mxu0 0.0
        %1360 = vmatpush1.msra.mxu0 0.0
        %1361 = vmatprep.subr.mxu0 0.0
        %1362 = vmatpush1.msra.mxu0 0.0
        %1363 = vmatprep.subr.mxu0 0.0
        %1364 = vmatpush1.msra.mxu0 0.0
        %1365 = vmatprep.subr.mxu0 0.0
        %1366 = vmatpush1.msra.mxu0 0.0
        %1367 = vmatprep.subr.mxu0 0.0
        %1368 = vmatpush1.msra.mxu0 0.0
        %1369 = vmatprep.subr.mxu0 0.0
        %1370 = vmatpush1.msra.mxu0 0.0
        %1371 = vmatprep.subr.mxu0 0.0
        %1372 = vmatpush1.msra.mxu0 0.0
        %1373 = vmatprep.mubr.f32.mxu0 0.0
        %v1374 = vand.u32 %v227, 4294901760
        %1375 = vmatmul.mubr.f32.gmra.mrb[0].mxu0 %v1374
        %v1376 = vpop.f32.mrb[0].mxu0
        %v1377 = vadd.f32 %v1226, %v1376
        %v1378 = vpop.f32.mrb[0].mxu0
        %1379 = vdwg.mxu0
        %1380 = vmatprep.subr.mxu0 0.0
        %v1381 = vand.u32 %v260, 4294901760
        %v1382 = vsub.f32 %v260, %v1381
        %1383 = vmatpush1.msra.mxu0 %v1382
        %1384 = vmatprep.subr.mxu0 0.0
        %v1385 = vand.u32 %v261, 4294901760
        %v1386 = vsub.f32 %v261, %v1385
        %1387 = vmatpush1.msra.mxu0 %v1386
        %1388 = vmatprep.subr.mxu0 0.0
        %v1389 = vand.u32 %v262, 4294901760
        %v1390 = vsub.f32 %v262, %v1389
        %1391 = vmatpush1.msra.mxu0 %v1390
        %1392 = vmatprep.subr.mxu0 0.0
        %v1393 = vand.u32 %v263, 4294901760
        %v1394 = vsub.f32 %v263, %v1393
        %1395 = vmatpush1.msra.mxu0 %v1394
        %1396 = vmatprep.subr.mxu0 0.0
        %v1397 = vand.u32 %v264, 4294901760
        %v1398 = vsub.f32 %v264, %v1397
        %1399 = vmatpush1.msra.mxu0 %v1398
        %1400 = vmatprep.subr.mxu0 0.0
        %v1401 = vand.u32 %v265, 4294901760
        %v1402 = vsub.f32 %v265, %v1401
        %1403 = vmatpush1.msra.mxu0 %v1402
        %1404 = vmatprep.subr.mxu0 0.0
        %v1405 = vand.u32 %v266, 4294901760
        %v1406 = vsub.f32 %v266, %v1405
        %1407 = vmatpush1.msra.mxu0 %v1406
        %1408 = vmatprep.subr.mxu0 0.0
        %v1409 = vand.u32 %v267, 4294901760
        %v1410 = vsub.f32 %v267, %v1409
        %1411 = vmatpush1.msra.mxu0 %v1410
        %1412 = vmatprep.subr.mxu0 0.0
        %v1413 = vand.u32 %v268, 4294901760
        %v1414 = vsub.f32 %v268, %v1413
        %1415 = vmatpush1.msra.mxu0 %v1414
        %1416 = vmatprep.subr.mxu0 0.0
        %v1417 = vand.u32 %v269, 4294901760
        %v1418 = vsub.f32 %v269, %v1417
        %1419 = vmatpush1.msra.mxu0 %v1418
        %1420 = vmatprep.subr.mxu0 0.0
        %v1421 = vand.u32 %v270, 4294901760
        %v1422 = vsub.f32 %v270, %v1421
        %1423 = vmatpush1.msra.mxu0 %v1422
        %1424 = vmatprep.subr.mxu0 0.0
        %v1425 = vand.u32 %v271, 4294901760
        %v1426 = vsub.f32 %v271, %v1425
        %1427 = vmatpush1.msra.mxu0 %v1426
        %1428 = vmatprep.subr.mxu0 0.0
        %v1429 = vand.u32 %v272, 4294901760
        %v1430 = vsub.f32 %v272, %v1429
        %1431 = vmatpush1.msra.mxu0 %v1430
        %1432 = vmatprep.subr.mxu0 0.0
        %v1433 = vand.u32 %v273, 4294901760
        %v1434 = vsub.f32 %v273, %v1433
        %1435 = vmatpush1.msra.mxu0 %v1434
        %1436 = vmatprep.subr.mxu0 0.0
        %v1437 = vand.u32 %v274, 4294901760
        %v1438 = vsub.f32 %v274, %v1437
        %1439 = vmatpush1.msra.mxu0 %v1438
        %1440 = vmatprep.subr.mxu0 0.0
        %v1441 = vand.u32 %v275, 4294901760
        %v1442 = vsub.f32 %v275, %v1441
        %1443 = vmatpush1.msra.mxu0 %v1442
        %1444 = vmatprep.subr.mxu0 0.0
        %1445 = vmatpush1.msra.mxu0 0.0
        %1446 = vmatprep.subr.mxu0 0.0
        %1447 = vmatpush1.msra.mxu0 0.0
        %1448 = vmatprep.subr.mxu0 0.0
        %1449 = vmatpush1.msra.mxu0 0.0
        %1450 = vmatprep.subr.mxu0 0.0
        %1451 = vmatpush1.msra.mxu0 0.0
        %1452 = vmatprep.subr.mxu0 0.0
        %1453 = vmatpush1.msra.mxu0 0.0
        %1454 = vmatprep.subr.mxu0 0.0
        %1455 = vmatpush1.msra.mxu0 0.0
        %1456 = vmatprep.subr.mxu0 0.0
        %1457 = vmatpush1.msra.mxu0 0.0
        %1458 = vmatprep.subr.mxu0 0.0
        %1459 = vmatpush1.msra.mxu0 0.0
        %1460 = vmatprep.subr.mxu0 0.0
        %1461 = vmatpush1.msra.mxu0 0.0
        %1462 = vmatprep.subr.mxu0 0.0
        %1463 = vmatpush1.msra.mxu0 0.0
        %1464 = vmatprep.subr.mxu0 0.0
        %1465 = vmatpush1.msra.mxu0 0.0
        %1466 = vmatprep.subr.mxu0 0.0
        %1467 = vmatpush1.msra.mxu0 0.0
        %1468 = vmatprep.subr.mxu0 0.0
        %1469 = vmatpush1.msra.mxu0 0.0
        %1470 = vmatprep.subr.mxu0 0.0
        %1471 = vmatpush1.msra.mxu0 0.0
        %1472 = vmatprep.subr.mxu0 0.0
        %1473 = vmatpush1.msra.mxu0 0.0
        %1474 = vmatprep.subr.mxu0 0.0
        %1475 = vmatpush1.msra.mxu0 0.0
        %1476 = vmatprep.mubr.f32.mxu0 0.0
        %v1477 = vand.u32 %v227, 4294901760
        %v1478 = vsub.f32 %v227, %v1477
        %1479 = vmatmul.mubr.f32.gmra.mrb[0].mxu0 %v1478
        %v1480 = vpop.f32.mrb[0].mxu0
        %v1481 = vadd.f32 %v1377, %v1480
        %v1482 = vpop.f32.mrb[0].mxu0
        %1483 = vdwg.mxu0
        %1484 = vmatprep.subr.mxu0 0.0
        %v1485 = vand.u32 %v260, 4294901760
        %1486 = vmatpush1.msra.mxu0 %v1485
        %1487 = vmatprep.subr.mxu0 0.0
        %v1488 = vand.u32 %v261, 4294901760
        %1489 = vmatpush1.msra.mxu0 %v1488
        %1490 = vmatprep.subr.mxu0 0.0
        %v1491 = vand.u32 %v262, 4294901760
        %1492 = vmatpush1.msra.mxu0 %v1491
        %1493 = vmatprep.subr.mxu0 0.0
        %v1494 = vand.u32 %v263, 4294901760
        %1495 = vmatpush1.msra.mxu0 %v1494
        %1496 = vmatprep.subr.mxu0 0.0
        %v1497 = vand.u32 %v264, 4294901760
        %1498 = vmatpush1.msra.mxu0 %v1497
        %1499 = vmatprep.subr.mxu0 0.0
        %v1500 = vand.u32 %v265, 4294901760
        %1501 = vmatpush1.msra.mxu0 %v1500
        %1502 = vmatprep.subr.mxu0 0.0
        %v1503 = vand.u32 %v266, 4294901760
        %1504 = vmatpush1.msra.mxu0 %v1503
        %1505 = vmatprep.subr.mxu0 0.0
        %v1506 = vand.u32 %v267, 4294901760
        %1507 = vmatpush1.msra.mxu0 %v1506
        %1508 = vmatprep.subr.mxu0 0.0
        %v1509 = vand.u32 %v268, 4294901760
        %1510 = vmatpush1.msra.mxu0 %v1509
        %1511 = vmatprep.subr.mxu0 0.0
        %v1512 = vand.u32 %v269, 4294901760
        %1513 = vmatpush1.msra.mxu0 %v1512
        %1514 = vmatprep.subr.mxu0 0.0
        %v1515 = vand.u32 %v270, 4294901760
        %1516 = vmatpush1.msra.mxu0 %v1515
        %1517 = vmatprep.subr.mxu0 0.0
        %v1518 = vand.u32 %v271, 4294901760
        %1519 = vmatpush1.msra.mxu0 %v1518
        %1520 = vmatprep.subr.mxu0 0.0
        %v1521 = vand.u32 %v272, 4294901760
        %1522 = vmatpush1.msra.mxu0 %v1521
        %1523 = vmatprep.subr.mxu0 0.0
        %v1524 = vand.u32 %v273, 4294901760
        %1525 = vmatpush1.msra.mxu0 %v1524
        %1526 = vmatprep.subr.mxu0 0.0
        %v1527 = vand.u32 %v274, 4294901760
        %1528 = vmatpush1.msra.mxu0 %v1527
        %1529 = vmatprep.subr.mxu0 0.0
        %v1530 = vand.u32 %v275, 4294901760
        %1531 = vmatpush1.msra.mxu0 %v1530
        %1532 = vmatprep.subr.mxu0 0.0
        %1533 = vmatpush1.msra.mxu0 0.0
        %1534 = vmatprep.subr.mxu0 0.0
        %1535 = vmatpush1.msra.mxu0 0.0
        %1536 = vmatprep.subr.mxu0 0.0
        %1537 = vmatpush1.msra.mxu0 0.0
        %1538 = vmatprep.subr.mxu0 0.0
        %1539 = vmatpush1.msra.mxu0 0.0
        %1540 = vmatprep.subr.mxu0 0.0
        %1541 = vmatpush1.msra.mxu0 0.0
        %1542 = vmatprep.subr.mxu0 0.0
        %1543 = vmatpush1.msra.mxu0 0.0
        %1544 = vmatprep.subr.mxu0 0.0
        %1545 = vmatpush1.msra.mxu0 0.0
        %1546 = vmatprep.subr.mxu0 0.0
        %1547 = vmatpush1.msra.mxu0 0.0
        %1548 = vmatprep.subr.mxu0 0.0
        %1549 = vmatpush1.msra.mxu0 0.0
        %1550 = vmatprep.subr.mxu0 0.0
        %1551 = vmatpush1.msra.mxu0 0.0
        %1552 = vmatprep.subr.mxu0 0.0
        %1553 = vmatpush1.msra.mxu0 0.0
        %1554 = vmatprep.subr.mxu0 0.0
        %1555 = vmatpush1.msra.mxu0 0.0
        %1556 = vmatprep.subr.mxu0 0.0
        %1557 = vmatpush1.msra.mxu0 0.0
        %1558 = vmatprep.subr.mxu0 0.0
        %1559 = vmatpush1.msra.mxu0 0.0
        %1560 = vmatprep.subr.mxu0 0.0
        %1561 = vmatpush1.msra.mxu0 0.0
        %1562 = vmatprep.subr.mxu0 0.0
        %1563 = vmatpush1.msra.mxu0 0.0
        %1564 = vmatprep.mubr.f32.mxu0 0.0
        %v1565 = vand.u32 %v227, 4294901760
        %v1566 = vsub.f32 %v227, %v1565
        %v1567 = vand.u32 %v1566, 4294901760
        %1568 = vmatmul.mubr.f32.gmra.mrb[0].mxu0 %v1567
        %v1569 = vpop.f32.mrb[0].mxu0
        %v1570 = vadd.f32 %v1481, %v1569
        %v1571 = vpop.f32.mrb[0].mxu0
        %1572 = vdwg.mxu0
        %1573 = vmatprep.subr.mxu0 0.0
        %v1574 = vand.u32 %v260, 4294901760
        %v1575 = vsub.f32 %v260, %v1574
        %v1576 = vand.u32 %v1575, 4294901760
        %1577 = vmatpush1.msra.mxu0 %v1576
        %1578 = vmatprep.subr.mxu0 0.0
        %v1579 = vand.u32 %v261, 4294901760
        %v1580 = vsub.f32 %v261, %v1579
        %v1581 = vand.u32 %v1580, 4294901760
        %1582 = vmatpush1.msra.mxu0 %v1581
        %1583 = vmatprep.subr.mxu0 0.0
        %v1584 = vand.u32 %v262, 4294901760
        %v1585 = vsub.f32 %v262, %v1584
        %v1586 = vand.u32 %v1585, 4294901760
        %1587 = vmatpush1.msra.mxu0 %v1586
        %1588 = vmatprep.subr.mxu0 0.0
        %v1589 = vand.u32 %v263, 4294901760
        %v1590 = vsub.f32 %v263, %v1589
        %v1591 = vand.u32 %v1590, 4294901760
        %1592 = vmatpush1.msra.mxu0 %v1591
        %1593 = vmatprep.subr.mxu0 0.0
        %v1594 = vand.u32 %v264, 4294901760
        %v1595 = vsub.f32 %v264, %v1594
        %v1596 = vand.u32 %v1595, 4294901760
        %1597 = vmatpush1.msra.mxu0 %v1596
        %1598 = vmatprep.subr.mxu0 0.0
        %v1599 = vand.u32 %v265, 4294901760
        %v1600 = vsub.f32 %v265, %v1599
        %v1601 = vand.u32 %v1600, 4294901760
        %1602 = vmatpush1.msra.mxu0 %v1601
        %1603 = vmatprep.subr.mxu0 0.0
        %v1604 = vand.u32 %v266, 4294901760
        %v1605 = vsub.f32 %v266, %v1604
        %v1606 = vand.u32 %v1605, 4294901760
        %1607 = vmatpush1.msra.mxu0 %v1606
        %1608 = vmatprep.subr.mxu0 0.0
        %v1609 = vand.u32 %v267, 4294901760
        %v1610 = vsub.f32 %v267, %v1609
        %v1611 = vand.u32 %v1610, 4294901760
        %1612 = vmatpush1.msra.mxu0 %v1611
        %1613 = vmatprep.subr.mxu0 0.0
        %v1614 = vand.u32 %v268, 4294901760
        %v1615 = vsub.f32 %v268, %v1614
        %v1616 = vand.u32 %v1615, 4294901760
        %1617 = vmatpush1.msra.mxu0 %v1616
        %1618 = vmatprep.subr.mxu0 0.0
        %v1619 = vand.u32 %v269, 4294901760
        %v1620 = vsub.f32 %v269, %v1619
        %v1621 = vand.u32 %v1620, 4294901760
        %1622 = vmatpush1.msra.mxu0 %v1621
        %1623 = vmatprep.subr.mxu0 0.0
        %v1624 = vand.u32 %v270, 4294901760
        %v1625 = vsub.f32 %v270, %v1624
        %v1626 = vand.u32 %v1625, 4294901760
        %1627 = vmatpush1.msra.mxu0 %v1626
        %1628 = vmatprep.subr.mxu0 0.0
        %v1629 = vand.u32 %v271, 4294901760
        %v1630 = vsub.f32 %v271, %v1629
        %v1631 = vand.u32 %v1630, 4294901760
        %1632 = vmatpush1.msra.mxu0 %v1631
        %1633 = vmatprep.subr.mxu0 0.0
        %v1634 = vand.u32 %v272, 4294901760
        %v1635 = vsub.f32 %v272, %v1634
        %v1636 = vand.u32 %v1635, 4294901760
        %1637 = vmatpush1.msra.mxu0 %v1636
        %1638 = vmatprep.subr.mxu0 0.0
        %v1639 = vand.u32 %v273, 4294901760
        %v1640 = vsub.f32 %v273, %v1639
        %v1641 = vand.u32 %v1640, 4294901760
        %1642 = vmatpush1.msra.mxu0 %v1641
        %1643 = vmatprep.subr.mxu0 0.0
        %v1644 = vand.u32 %v274, 4294901760
        %v1645 = vsub.f32 %v274, %v1644
        %v1646 = vand.u32 %v1645, 4294901760
        %1647 = vmatpush1.msra.mxu0 %v1646
        %1648 = vmatprep.subr.mxu0 0.0
        %v1649 = vand.u32 %v275, 4294901760
        %v1650 = vsub.f32 %v275, %v1649
        %v1651 = vand.u32 %v1650, 4294901760
        %1652 = vmatpush1.msra.mxu0 %v1651
        %1653 = vmatprep.subr.mxu0 0.0
        %1654 = vmatpush1.msra.mxu0 0.0
        %1655 = vmatprep.subr.mxu0 0.0
        %1656 = vmatpush1.msra.mxu0 0.0
        %1657 = vmatprep.subr.mxu0 0.0
        %1658 = vmatpush1.msra.mxu0 0.0
        %1659 = vmatprep.subr.mxu0 0.0
        %1660 = vmatpush1.msra.mxu0 0.0
        %1661 = vmatprep.subr.mxu0 0.0
        %1662 = vmatpush1.msra.mxu0 0.0
        %1663 = vmatprep.subr.mxu0 0.0
        %1664 = vmatpush1.msra.mxu0 0.0
        %1665 = vmatprep.subr.mxu0 0.0
        %1666 = vmatpush1.msra.mxu0 0.0
        %1667 = vmatprep.subr.mxu0 0.0
        %1668 = vmatpush1.msra.mxu0 0.0
        %1669 = vmatprep.subr.mxu0 0.0
        %1670 = vmatpush1.msra.mxu0 0.0
        %1671 = vmatprep.subr.mxu0 0.0
        %1672 = vmatpush1.msra.mxu0 0.0
        %1673 = vmatprep.subr.mxu0 0.0
        %1674 = vmatpush1.msra.mxu0 0.0
        %1675 = vmatprep.subr.mxu0 0.0
        %1676 = vmatpush1.msra.mxu0 0.0
        %1677 = vmatprep.subr.mxu0 0.0
        %1678 = vmatpush1.msra.mxu0 0.0
        %1679 = vmatprep.subr.mxu0 0.0
        %1680 = vmatpush1.msra.mxu0 0.0
        %1681 = vmatprep.subr.mxu0 0.0
        %1682 = vmatpush1.msra.mxu0 0.0
        %1683 = vmatprep.subr.mxu0 0.0
        %1684 = vmatpush1.msra.mxu0 0.0
        %1685 = vmatprep.mubr.f32.mxu0 0.0
        %v1686 = vand.u32 %v227, 4294901760
        %1687 = vmatmul.mubr.f32.gmra.mrb[0].mxu0 %v1686
        %v1688 = vpop.f32.mrb[0].mxu0
        %v1689 = vadd.f32 %v1570, %v1688
        %v1690 = vpop.f32.mrb[0].mxu0
        %1691 = vdwg.mxu0
        %1692 = vmatprep.subr.mxu0 0.0
        %v1693 = vand.u32 %v260, 4294901760
        %1694 = vmatpush1.msra.mxu0 %v1693
        %1695 = vmatprep.subr.mxu0 0.0
        %v1696 = vand.u32 %v261, 4294901760
        %1697 = vmatpush1.msra.mxu0 %v1696
        %1698 = vmatprep.subr.mxu0 0.0
        %v1699 = vand.u32 %v262, 4294901760
        %1700 = vmatpush1.msra.mxu0 %v1699
        %1701 = vmatprep.subr.mxu0 0.0
        %v1702 = vand.u32 %v263, 4294901760
        %1703 = vmatpush1.msra.mxu0 %v1702
        %1704 = vmatprep.subr.mxu0 0.0
        %v1705 = vand.u32 %v264, 4294901760
        %1706 = vmatpush1.msra.mxu0 %v1705
        %1707 = vmatprep.subr.mxu0 0.0
        %v1708 = vand.u32 %v265, 4294901760
        %1709 = vmatpush1.msra.mxu0 %v1708
        %1710 = vmatprep.subr.mxu0 0.0
        %v1711 = vand.u32 %v266, 4294901760
        %1712 = vmatpush1.msra.mxu0 %v1711
        %1713 = vmatprep.subr.mxu0 0.0
        %v1714 = vand.u32 %v267, 4294901760
        %1715 = vmatpush1.msra.mxu0 %v1714
        %1716 = vmatprep.subr.mxu0 0.0
        %v1717 = vand.u32 %v268, 4294901760
        %1718 = vmatpush1.msra.mxu0 %v1717
        %1719 = vmatprep.subr.mxu0 0.0
        %v1720 = vand.u32 %v269, 4294901760
        %1721 = vmatpush1.msra.mxu0 %v1720
        %1722 = vmatprep.subr.mxu0 0.0
        %v1723 = vand.u32 %v270, 4294901760
        %1724 = vmatpush1.msra.mxu0 %v1723
        %1725 = vmatprep.subr.mxu0 0.0
        %v1726 = vand.u32 %v271, 4294901760
        %1727 = vmatpush1.msra.mxu0 %v1726
        %1728 = vmatprep.subr.mxu0 0.0
        %v1729 = vand.u32 %v272, 4294901760
        %1730 = vmatpush1.msra.mxu0 %v1729
        %1731 = vmatprep.subr.mxu0 0.0
        %v1732 = vand.u32 %v273, 4294901760
        %1733 = vmatpush1.msra.mxu0 %v1732
        %1734 = vmatprep.subr.mxu0 0.0
        %v1735 = vand.u32 %v274, 4294901760
        %1736 = vmatpush1.msra.mxu0 %v1735
        %1737 = vmatprep.subr.mxu0 0.0
        %v1738 = vand.u32 %v275, 4294901760
        %1739 = vmatpush1.msra.mxu0 %v1738
        %1740 = vmatprep.subr.mxu0 0.0
        %1741 = vmatpush1.msra.mxu0 0.0
        %1742 = vmatprep.subr.mxu0 0.0
        %1743 = vmatpush1.msra.mxu0 0.0
        %1744 = vmatprep.subr.mxu0 0.0
        %1745 = vmatpush1.msra.mxu0 0.0
        %1746 = vmatprep.subr.mxu0 0.0
        %1747 = vmatpush1.msra.mxu0 0.0
        %1748 = vmatprep.subr.mxu0 0.0
        %1749 = vmatpush1.msra.mxu0 0.0
        %1750 = vmatprep.subr.mxu0 0.0
        %1751 = vmatpush1.msra.mxu0 0.0
        %1752 = vmatprep.subr.mxu0 0.0
        %1753 = vmatpush1.msra.mxu0 0.0
        %1754 = vmatprep.subr.mxu0 0.0
        %1755 = vmatpush1.msra.mxu0 0.0
        %1756 = vmatprep.subr.mxu0 0.0
        %1757 = vmatpush1.msra.mxu0 0.0
        %1758 = vmatprep.subr.mxu0 0.0
        %1759 = vmatpush1.msra.mxu0 0.0
        %1760 = vmatprep.subr.mxu0 0.0
        %1761 = vmatpush1.msra.mxu0 0.0
        %1762 = vmatprep.subr.mxu0 0.0
        %1763 = vmatpush1.msra.mxu0 0.0
        %1764 = vmatprep.subr.mxu0 0.0
        %1765 = vmatpush1.msra.mxu0 0.0
        %1766 = vmatprep.subr.mxu0 0.0
        %1767 = vmatpush1.msra.mxu0 0.0
        %1768 = vmatprep.subr.mxu0 0.0
        %1769 = vmatpush1.msra.mxu0 0.0
        %1770 = vmatprep.subr.mxu0 0.0
        %1771 = vmatpush1.msra.mxu0 0.0
        %1772 = vmatprep.mubr.f32.mxu0 0.0
        %v1773 = vand.u32 %v227, 4294901760
        %1774 = vmatmul.mubr.f32.gmra.mrb[0].mxu0 %v1773
        %v1775 = vpop.f32.mrb[0].mxu0
        %v1776 = vadd.f32 %v1689, %v1775
        %v1777 = vpop.f32.mrb[0].mxu0
        %1778 = vdwg.mxu0
        %1779 = vst [vmem:[%s201] sm:$0xff] %v1776
        %s1780 = sand.u32 %s97, 1
        %s1781 = scalar_lea.sflag [#allocation4], %s1780
        %s1782 = sand.u32 %s97, 1
        %s1783 = smul.addr %s1782, 8
        %s1784 = scalar_lea.vmem [#allocation7], %s1783
        // Predicated region
        $region41: #{tpu_custom_call.1} parent=31 // pred_check
          %p1785 = pneg %p107
        $region42: #{tpu_custom_call.1} parent=31 // pred_check_branch
          %1787 = sbr.rel (%p1785) target = $region44
        $region43: #{tpu_custom_call.1} parent=31 // pred_region
          %s1789 = ssub.s32 128, 128
          %1790 = vsyncadd %s1781, %s1789
          %s1791 = smul.addr %s21, 128
          %s1792 = scalar_lea.hbm %s3, %s1791
          %s1794 = sshll.u32 %s1784, 4
          %s1795 = int_to_ptr.vmem [resolvable:$true] %s1794
          %1797 = dma.vmem_to_hbm [thread:$0]  %s1795, 128, %s1792, %s1781
        $region44: #{tpu_custom_call.1} parent=31 // pred_fallthru
          _
      $region32: #{tpu_custom_call.1} parent=5 // pred_fallthru
        _
      %p1798 = scmp.le.s32.totalorder 2, %s16
      // Predicated region
      $region45: #{tpu_custom_call.1} parent=5 // pred_check
        %p1799 = pneg %p1798
      $region46: #{tpu_custom_call.1} parent=5 // pred_check_branch
        %1801 = sbr.rel (%p1799) target = $region48
      $region47: #{tpu_custom_call.1} parent=5 // pred_region
        %s1802 = ssub.s32 %s16, 2
        // Predicated region
        $region49: #{tpu_custom_call.1} parent=47 // pred_check
          %p1803 = pneg %p113
        $region50: #{tpu_custom_call.1} parent=47 // pred_check_branch
          %1805 = sbr.rel (%p1803) target = $region52
        $region51: #{tpu_custom_call.1} parent=47 // pred_region
          %s1806 = sand.u32 %s98, 1
          %s1807 = scalar_lea.sflag [#allocation4], %s1806
          %s1808 = sand.u32 %s98, 1
          %s1809 = smul.addr %s1808, 8
          %s1810 = scalar_lea.vmem [#allocation7], %s1809
          %1811 = dma.done %s1807, 128
        $region52: #{tpu_custom_call.1} parent=47 // pred_fallthru
          _
      $region48: #{tpu_custom_call.1} parent=5 // pred_fallthru
        _
    $region6: #{tpu_custom_call.1} parent=1 // loop_footer
      %s20 = sadd.s32 1, %s16
    $region7: #{tpu_custom_call.1} parent=1 // loop_footer_branch
      %15 = sbr.rel target = $region3
    $region8: #{tpu_custom_call.1} parent=1 // loop_exit
      _
    %1812 = vsyncpa [#allocation3], 1
    %s1813 = scalar_lea.sflag [#allocation3], 1
    %1814 = vsyncpa %s1813, 1
    %1815 = vsyncpa [#allocation6], 1
    %1816 = vsyncpa [#allocation4], 1
    %s1817 = scalar_lea.sflag [#allocation4], 1
    %1818 = vsyncpa %s1817, 1

</llo_original>
